<compile_context>
chip_gen: v7x
topology: tpu7x:2x2x1
jax: 0.10.0
libtpu: 0.0.40
codegen_flags: <defaults>
</compile_context>

<pallas_src>
import functools
import math

import jax
import jax.numpy as jnp
from jax.experimental import pallas as pl
from jax.experimental.pallas import tpu as pltpu


def _layernorm(v, g, b, eps=1e-5):
    mu = jnp.mean(v, axis=-1, keepdims=True)
    var = jnp.mean((v - mu) ** 2, axis=-1, keepdims=True)
    return (v - mu) * jax.lax.rsqrt(var + eps) * g + b


def rab_kernel(x_ref,
               wqkv_ref, bqkv_ref, wo_ref, bo_ref,
               g1_ref, beta1_ref, g2_ref, beta2_ref,
               wfc_ref, bfc_ref, wpj_ref, bpj_ref,
               o_ref,
               q_scr, k_scr, v_scr, attn_scr,
               *, n_head, h_tile):
    Bt, S, D = x_ref.shape
    hd = D // n_head
    BS = Bt * S

    # One tall (Bt*S, D) slab per grid step (better MXU M-fill, amortized step cost).
    x = x_ref[...].astype(jnp.float32).reshape(BS, D)

    # ---------------- x = x + attn(ln_1(x)) ----------------
    ln1 = _layernorm(x, g1_ref[...], beta1_ref[...])
    # Fused QKV projection; 1/sqrt(hd) is already folded into the q columns of wqkv.
    qkv = jnp.dot(ln1.astype(jnp.bfloat16), wqkv_ref[...],
                  preferred_element_type=jnp.float32) + bqkv_ref[...]   # (BS, 3D) f32
    qkv = qkv.astype(jnp.bfloat16)   # cast once; the f32 qkv is dead from here on

    # Regroup into (batch*head)-major bf16 scratch with static 2D slice copies.
    for h in range(n_head):
        for b in range(Bt):
            rows = slice(b * S, (b + 1) * S)
            g = h * Bt + b
            q_scr[g] = qkv[rows, h * hd:(h + 1) * hd]
            k_scr[g] = qkv[rows, D + h * hd:D + (h + 1) * hd]
            v_scr[g] = qkv[rows, 2 * D + h * hd:2 * D + (h + 1) * hd]

    # (batch*head)-batched MXU matmuls: bf16 in, f32 accumulate.
    s = jnp.einsum('bqd,bkd->bqk', q_scr[...], k_scr[...],
                   preferred_element_type=jnp.float32)                  # (Bt*H, S, S)
    s = s - jnp.max(s, axis=-1, keepdims=True)
    p = jnp.exp(s)
    l = jnp.sum(p, axis=-1, keepdims=True)
    ctx = jnp.einsum('bqk,bkd->bqd', p.astype(jnp.bfloat16), v_scr[...],
                     preferred_element_type=jnp.float32)                # (Bt*H, S, hd)
    # Deferred softmax normalization: hd-wide multiplies instead of S-wide.
    ctx = (ctx * pl.reciprocal(l, approx=True)).astype(jnp.bfloat16)

    # Scatter heads back into a lane-contiguous (BS, D) bf16 slab for the out-proj.
    for h in range(n_head):
        for b in range(Bt):
            attn_scr[b * S:(b + 1) * S, h * hd:(h + 1) * hd] = ctx[h * Bt + b]

    attn = jnp.dot(attn_scr[...], wo_ref[...],
                   preferred_element_type=jnp.float32) + bo_ref[...]
    x = x + attn

    # ---------------- x = x + mlp(ln_2(x)) ----------------
    ln2 = _layernorm(x, g2_ref[...], beta2_ref[...]).astype(jnp.bfloat16)
    hidden = wfc_ref.shape[1]
    mlp = None
    for t in range(hidden // h_tile):                      # static, unrolled
        lo = t * h_tile
        hmid = jnp.dot(ln2, wfc_ref[:, lo:lo + h_tile],
                       preferred_element_type=jnp.float32) + bfc_ref[:, lo:lo + h_tile]
        hmid = hmid * jax.nn.sigmoid(1.702 * hmid)         # QuickGELU (f32; v5e-safe)
        part = jnp.dot(hmid.astype(jnp.bfloat16), wpj_ref[lo:lo + h_tile, :],
                       preferred_element_type=jnp.float32)
        mlp = part if mlp is None else mlp + part
    x = x + mlp + bpj_ref[...]

    o_ref[...] = x.reshape(Bt, S, D).astype(o_ref.dtype)


def _pick_batch_tile(N, S):
    # Target ~512-1024 rows of M per grid step, but the tile must divide N.
    target = max(1, min(8, 1024 // max(S, 1)))
    for bt in range(min(target, N), 0, -1):
        if N % bt == 0:
            return bt
    return 1


def _pick_hidden_tile(hidden):
    # Tile the 4*D MLP hidden dim so the f32 activation slab stays small in VMEM.
    if hidden <= 2048:
        return hidden
    for t in range(2048, 127, -128):
        if hidden % t == 0:
            return t
    return hidden


def _vmem_limit_bytes(D, S, Bt, n_head):
    weights = 12 * D * D * 2 + 16 * D * 4          # bf16 matmul weights + f32 biases/LN
    io = 2 * 2 * Bt * S * D * 4                    # double-buffered in/out blocks (f32)
    scratch = 4 * Bt * S * D * 2                   # q/k/v/attn bf16 scratch
    act = (Bt * S * 5 * D * 4                      # x / ln / qkv-sized f32 live values
           + Bt * n_head * S * S * 8               # scores + probs (f32)
           + Bt * S * min(4 * D, 2048) * 4)        # one MLP hidden tile (f32)
    est = int(1.3 * (weights + io + scratch + act)) + (8 << 20)
    # 64 MiB ceiling keeps us inside v7x's physical VMEM; 32 MiB floor lifts the
    # small default scoped limit on v5e/v6e.
    return max(32 << 20, min(64 << 20, est))


def residual_attention_block_nle(x_nle, params, n_head):
    """Batch-major entry point: x_nle is (N, L, D); returns (N, L, D).

    Prefer this for stacked blocks -- it does no HBM transposes."""
    N, S, D = x_nle.shape
    assert D % n_head == 0
    hd = D // n_head
    scale = 1.0 / math.sqrt(hd)

    # Fold the 1/sqrt(hd) q-scale into the packed QKV weight/bias (free under jit).
    # Big matmul weights cast to bf16 once; biases / LayerNorm params stay f32.
    wqkv = jnp.concatenate([params["wq"] * scale, params["wk"], params["wv"]],
                           axis=1).astype(jnp.bfloat16)
    bqkv = jnp.concatenate([params["bq"] * scale, params["bk"], params["bv"]],
                           axis=1).astype(jnp.float32)
    weights = [
        wqkv, bqkv,
        params["wo"].astype(jnp.bfloat16), params["bo"].astype(jnp.float32),
        params["g1"].astype(jnp.float32), params["beta1"].astype(jnp.float32),
        params["g2"].astype(jnp.float32), params["beta2"].astype(jnp.float32),
        params["wfc"].astype(jnp.bfloat16), params["bfc"].astype(jnp.float32),
        params["wpj"].astype(jnp.bfloat16), params["bpj"].astype(jnp.float32),
    ]

    Bt = _pick_batch_tile(N, S)
    h_tile = _pick_hidden_tile(4 * D)

    def weight_spec(p):
        # Grid-invariant weight block: single VMEM residency, no double buffering.
        return pl.BlockSpec(p.shape, lambda b: (0,) * p.ndim,
                            pipeline_mode=pl.Buffered(1))

    in_specs = ([pl.BlockSpec((Bt, S, D), lambda b: (b, 0, 0))]
                + [weight_spec(p) for p in weights])

    fn = pl.pallas_call(
        functools.partial(rab_kernel, n_head=n_head, h_tile=h_tile),
        out_shape=jax.ShapeDtypeStruct((N, S, D), x_nle.dtype),
        grid_spec=pltpu.PrefetchScalarGridSpec(
            num_scalar_prefetch=0,
            grid=(N // Bt,),
            in_specs=in_specs,
            out_specs=pl.BlockSpec((Bt, S, D), lambda b: (b, 0, 0)),
            scratch_shapes=[
                pltpu.VMEM((Bt * n_head, S, hd), jnp.bfloat16),   # q (batch*head major)
                pltpu.VMEM((Bt * n_head, S, hd), jnp.bfloat16),   # k
                pltpu.VMEM((Bt * n_head, S, hd), jnp.bfloat16),   # v
                pltpu.VMEM((Bt * S, D), jnp.bfloat16),            # attn (pre out-proj)
            ]),
        compiler_params=pltpu.CompilerParams(
            dimension_semantics=("parallel",),
            vmem_limit_bytes=_vmem_limit_bytes(D, S, Bt, n_head)),
    )
    return fn(x_nle, *weights)


def residual_attention_block(x_lne, params, n_head):
    """PyTorch layout: x_lne is (L, N, D); returns (L, N, D)."""
    out = residual_attention_block_nle(jnp.transpose(x_lne, (1, 0, 2)), params, n_head)
    return jnp.transpose(out, (1, 0, 2))


def init_params(key, d_model, n_head):
    ks = jax.random.split(key, 10)
    s = 0.02
    D = d_model
    # nn.MultiheadAttention in_proj acts as y = x @ W.T + b -> weights stored transposed (D, D)
    return {
        "wq": jax.random.normal(ks[0], (D, D), jnp.float32) * s,
        "wk": jax.random.normal(ks[1], (D, D), jnp.float32) * s,
        "wv": jax.random.normal(ks[2], (D, D), jnp.float32) * s,
        "bq": jax.random.normal(ks[3], (1, D), jnp.float32) * s,
        "bk": jax.random.normal(ks[4], (1, D), jnp.float32) * s,
        "bv": jax.random.normal(ks[5], (1, D), jnp.float32) * s,
        "wo": jax.random.normal(ks[6], (D, D), jnp.float32) * s,
        "bo": jnp.zeros((1, D), jnp.float32),
        "g1": jnp.ones((1, D), jnp.float32),
        "beta1": jnp.zeros((1, D), jnp.float32),
        "g2": jnp.ones((1, D), jnp.float32),
        "beta2": jnp.zeros((1, D), jnp.float32),
        "wfc": jax.random.normal(ks[7], (D, 4 * D), jnp.float32) * s,
        "bfc": jax.random.normal(ks[8], (1, 4 * D), jnp.float32) * s,
        "wpj": jax.random.normal(ks[9], (4 * D, D), jnp.float32) * s,
        "bpj": jnp.zeros((1, D), jnp.float32),
    }


def _reference(x_lne, params, n_head):
    """Pure-JAX f32 reference of the PyTorch block (for tolerance check)."""
    x = x_lne.astype(jnp.float32)
    L, N, D = x.shape
    hd = D // n_head

    def ln(v, g, b):
        mu = jnp.mean(v, -1, keepdims=True)
        var = jnp.mean((v - mu) ** 2, -1, keepdims=True)
        return (v - mu) * jax.lax.rsqrt(var + 1e-5) * g + b

    h1 = ln(x, params["g1"][0], params["beta1"][0])
    q = h1 @ params["wq"] + params["bq"][0]
    k = h1 @ params["wk"] + params["bk"][0]
    v = h1 @ params["wv"] + params["bv"][0]
    qs = q.reshape(L, N, n_head, hd) * (1.0 / hd ** 0.5)
    ks = k.reshape(L, N, n_head, hd)
    vs = v.reshape(L, N, n_head, hd)
    s = jnp.einsum('lnhd,mnhd->nhlm', qs, ks)
    p = jax.nn.softmax(s, axis=-1)
    ctx = jnp.einsum('nhlm,mnhd->lnhd', p, vs).reshape(L, N, D)
    x = x + ctx @ params["wo"] + params["bo"][0]
    h2 = ln(x, params["g2"][0], params["beta2"][0])
    mid = h2 @ params["wfc"] + params["bfc"][0]
    mid = mid * jax.nn.sigmoid(1.702 * mid)
    x = x + mid @ params["wpj"] + params["bpj"][0]
    return x


if __name__ == "__main__":
    seq, batch, d_model, n_head = 8, 2, 32, 4
    key = jax.random.PRNGKey(0)
    kx, kp = jax.random.split(key)
    x = jax.random.normal(kx, (seq, batch, d_model), jnp.float32)   # (L, N, E)
    params = init_params(kp, d_model, n_head)

    out = residual_attention_block(x, params, n_head)
    out = jax.block_until_ready(out)
    assert out.shape == (seq, batch, d_model)

    ref = _reference(x, params, n_head)
    max_err = float(jnp.max(jnp.abs(out - ref)))
    assert max_err < 2e-2, f"max abs err {max_err}"

    print("KERNEL_OK")
</pallas_src>

<mosaic_0001>
module attributes {stable_mosaic.version = 11 : i64} {
  func.func @rab_kernel(%arg0: i32, %arg1: memref<2x8x32xf32, #tpu.memory_space<vmem>>, %arg2: memref<32x96xbf16, #tpu.memory_space<vmem>>, %arg3: memref<1x96xf32, #tpu.memory_space<vmem>>, %arg4: memref<32x32xbf16, #tpu.memory_space<vmem>>, %arg5: memref<1x32xf32, #tpu.memory_space<vmem>>, %arg6: memref<1x32xf32, #tpu.memory_space<vmem>>, %arg7: memref<1x32xf32, #tpu.memory_space<vmem>>, %arg8: memref<1x32xf32, #tpu.memory_space<vmem>>, %arg9: memref<1x32xf32, #tpu.memory_space<vmem>>, %arg10: memref<32x128xbf16, #tpu.memory_space<vmem>>, %arg11: memref<1x128xf32, #tpu.memory_space<vmem>>, %arg12: memref<128x32xbf16, #tpu.memory_space<vmem>>, %arg13: memref<1x32xf32, #tpu.memory_space<vmem>>, %arg14: memref<2x8x32xf32, #tpu.memory_space<vmem>>, %arg15: memref<8x8x8xbf16, #tpu.memory_space<vmem>>, %arg16: memref<8x8x8xbf16, #tpu.memory_space<vmem>>, %arg17: memref<8x8x8xbf16, #tpu.memory_space<vmem>>, %arg18: memref<16x32xbf16, #tpu.memory_space<vmem>>) attributes {dimension_semantics = [#tpu.dimension_semantics<parallel>], iteration_bounds = array<i64: 1>, scalar_prefetch = 0 : i64, scratch_operands = 4 : i64, tpu.core_type = #tpu.core_type<tc>, window_params = [{transform_indices = @transform_0, window_bounds = array<i64: 2, 8, 32>}, {pipeline_mode = #tpu.pipeline_mode<synchronous>, transform_indices = @transform_1, window_bounds = array<i64: 32, 96>}, {pipeline_mode = #tpu.pipeline_mode<synchronous>, transform_indices = @transform_2, window_bounds = array<i64: 1, 96>}, {pipeline_mode = #tpu.pipeline_mode<synchronous>, transform_indices = @transform_3, window_bounds = array<i64: 32, 32>}, {pipeline_mode = #tpu.pipeline_mode<synchronous>, transform_indices = @transform_4, window_bounds = array<i64: 1, 32>}, {pipeline_mode = #tpu.pipeline_mode<synchronous>, transform_indices = @transform_5, window_bounds = array<i64: 1, 32>}, {pipeline_mode = #tpu.pipeline_mode<synchronous>, transform_indices = @transform_6, window_bounds = array<i64: 1, 32>}, {pipeline_mode = #tpu.pipeline_mode<synchronous>, transform_indices = @transform_7, window_bounds = array<i64: 1, 32>}, {pipeline_mode = #tpu.pipeline_mode<synchronous>, transform_indices = @transform_8, window_bounds = array<i64: 1, 32>}, {pipeline_mode = #tpu.pipeline_mode<synchronous>, transform_indices = @transform_9, window_bounds = array<i64: 32, 128>}, {pipeline_mode = #tpu.pipeline_mode<synchronous>, transform_indices = @transform_10, window_bounds = array<i64: 1, 128>}, {pipeline_mode = #tpu.pipeline_mode<synchronous>, transform_indices = @transform_11, window_bounds = array<i64: 128, 32>}, {pipeline_mode = #tpu.pipeline_mode<synchronous>, transform_indices = @transform_12, window_bounds = array<i64: 1, 32>}, {transform_indices = @transform_13, window_bounds = array<i64: 2, 8, 32>}]} {
    %c0 = arith.constant 0 : index
    %c0_0 = arith.constant 0 : index
    %c0_1 = arith.constant 0 : index
    %0 = vector.load %arg1[%c0, %c0_0, %c0_1] : memref<2x8x32xf32, #tpu.memory_space<vmem>>, vector<2x8x32xf32>
    %1 = vector.shape_cast %0 : vector<2x8x32xf32> to vector<16x32xf32>
    %c0_2 = arith.constant 0 : index
    %c0_3 = arith.constant 0 : index
    %2 = vector.load %arg6[%c0_2, %c0_3] : memref<1x32xf32, #tpu.memory_space<vmem>>, vector<1x32xf32>
    %c0_4 = arith.constant 0 : index
    %c0_5 = arith.constant 0 : index
    %3 = vector.load %arg7[%c0_4, %c0_5] : memref<1x32xf32, #tpu.memory_space<vmem>>, vector<1x32xf32>
    %cst = arith.constant dense<0.000000e+00> : vector<16xf32>
    %4 = vector.multi_reduction <add>, %1, %cst [1] : vector<16x32xf32> to vector<16xf32>
    %5 = vector.shape_cast %4 : vector<16xf32> to vector<16x1xf32>
    %cst_6 = arith.constant 3.200000e+01 : f32
    %6 = vector.broadcast %cst_6 : f32 to vector<16x1xf32>
    %7 = arith.divf %5, %6 : vector<16x1xf32>
    %8 = vector.broadcast %7 : vector<16x1xf32> to vector<16x32xf32>
    %9 = arith.subf %1, %8 : vector<16x32xf32>
    %10 = arith.mulf %9, %9 : vector<16x32xf32>
    %cst_7 = arith.constant dense<0.000000e+00> : vector<16xf32>
    %11 = vector.multi_reduction <add>, %10, %cst_7 [1] : vector<16x32xf32> to vector<16xf32>
    %12 = vector.shape_cast %11 : vector<16xf32> to vector<16x1xf32>
    %cst_8 = arith.constant 3.200000e+01 : f32
    %13 = vector.broadcast %cst_8 : f32 to vector<16x1xf32>
    %14 = arith.divf %12, %13 : vector<16x1xf32>
    %15 = vector.broadcast %7 : vector<16x1xf32> to vector<16x32xf32>
    %16 = arith.subf %1, %15 : vector<16x32xf32>
    %cst_9 = arith.constant 9.99999974E-6 : f32
    %17 = vector.broadcast %cst_9 : f32 to vector<16x1xf32>
    %18 = arith.addf %14, %17 : vector<16x1xf32>
    %19 = math.rsqrt %18 : vector<16x1xf32>
    %20 = vector.broadcast %19 : vector<16x1xf32> to vector<16x32xf32>
    %21 = arith.mulf %16, %20 : vector<16x32xf32>
    %22 = vector.broadcast %2 : vector<1x32xf32> to vector<16x32xf32>
    %23 = arith.mulf %21, %22 : vector<16x32xf32>
    %24 = vector.broadcast %3 : vector<1x32xf32> to vector<16x32xf32>
    %25 = arith.addf %23, %24 : vector<16x32xf32>
    %26 = arith.truncf %25 : vector<16x32xf32> to vector<16x32xbf16>
    %c0_10 = arith.constant 0 : index
    %c0_11 = arith.constant 0 : index
    %27 = vector.load %arg2[%c0_10, %c0_11] : memref<32x96xbf16, #tpu.memory_space<vmem>>, vector<32x96xbf16>
    %cst_12 = arith.constant dense<0.000000e+00> : vector<16x96xf32>
    %28 = tpu.matmul %26, %27, %cst_12 {dimension_numbers = #tpu.dot_dimension_numbers<[1], [0], [0], [1], [0, 0, 1, 1], [], []>} : vector<16x32xbf16>, vector<32x96xbf16>, vector<16x96xf32> -> vector<16x96xf32>
    %c0_13 = arith.constant 0 : index
    %c0_14 = arith.constant 0 : index
    %29 = vector.load %arg3[%c0_13, %c0_14] : memref<1x96xf32, #tpu.memory_space<vmem>>, vector<1x96xf32>
    %30 = vector.broadcast %29 : vector<1x96xf32> to vector<16x96xf32>
    %31 = arith.addf %28, %30 : vector<16x96xf32>
    %32 = arith.truncf %31 : vector<16x96xf32> to vector<16x96xbf16>
    %33 = vector.extract_strided_slice %32 {offsets = [0, 0], sizes = [8, 8], strides = [1, 1]} : vector<16x96xbf16> to vector<8x8xbf16>
    %c0_15 = arith.constant 0 : index
    %c0_16 = arith.constant 0 : index
    %c0_17 = arith.constant 0 : index
    %34 = vector.load %arg15[%c0_15, %c0_16, %c0_17] : memref<8x8x8xbf16, #tpu.memory_space<vmem>>, vector<1x8x8xbf16>
    %35 = vector.shape_cast %34 : vector<1x8x8xbf16> to vector<8x8xbf16>
    %36 = vector.shape_cast %33 : vector<8x8xbf16> to vector<1x8x8xbf16>
    tpu.vector_store %arg15[%c0_15, %c0_16, %c0_17], %36 {strides = array<i32>} : memref<8x8x8xbf16, #tpu.memory_space<vmem>>, vector<1x8x8xbf16>,
    %37 = vector.extract_strided_slice %32 {offsets = [0, 32], sizes = [8, 8], strides = [1, 1]} : vector<16x96xbf16> to vector<8x8xbf16>
    %c0_18 = arith.constant 0 : index
    %c0_19 = arith.constant 0 : index
    %c0_20 = arith.constant 0 : index
    %38 = vector.load %arg16[%c0_18, %c0_19, %c0_20] : memref<8x8x8xbf16, #tpu.memory_space<vmem>>, vector<1x8x8xbf16>
    %39 = vector.shape_cast %38 : vector<1x8x8xbf16> to vector<8x8xbf16>
    %40 = vector.shape_cast %37 : vector<8x8xbf16> to vector<1x8x8xbf16>
    tpu.vector_store %arg16[%c0_18, %c0_19, %c0_20], %40 {strides = array<i32>} : memref<8x8x8xbf16, #tpu.memory_space<vmem>>, vector<1x8x8xbf16>,
    %41 = vector.extract_strided_slice %32 {offsets = [0, 64], sizes = [8, 8], strides = [1, 1]} : vector<16x96xbf16> to vector<8x8xbf16>
    %c0_21 = arith.constant 0 : index
    %c0_22 = arith.constant 0 : index
    %c0_23 = arith.constant 0 : index
    %42 = vector.load %arg17[%c0_21, %c0_22, %c0_23] : memref<8x8x8xbf16, #tpu.memory_space<vmem>>, vector<1x8x8xbf16>
    %43 = vector.shape_cast %42 : vector<1x8x8xbf16> to vector<8x8xbf16>
    %44 = vector.shape_cast %41 : vector<8x8xbf16> to vector<1x8x8xbf16>
    tpu.vector_store %arg17[%c0_21, %c0_22, %c0_23], %44 {strides = array<i32>} : memref<8x8x8xbf16, #tpu.memory_space<vmem>>, vector<1x8x8xbf16>,
    %45 = vector.extract_strided_slice %32 {offsets = [8, 0], sizes = [8, 8], strides = [1, 1]} : vector<16x96xbf16> to vector<8x8xbf16>
    %c1 = arith.constant 1 : index
    %c0_24 = arith.constant 0 : index
    %c0_25 = arith.constant 0 : index
    %46 = vector.load %arg15[%c1, %c0_24, %c0_25] : memref<8x8x8xbf16, #tpu.memory_space<vmem>>, vector<1x8x8xbf16>
    %47 = vector.shape_cast %46 : vector<1x8x8xbf16> to vector<8x8xbf16>
    %48 = vector.shape_cast %45 : vector<8x8xbf16> to vector<1x8x8xbf16>
    tpu.vector_store %arg15[%c1, %c0_24, %c0_25], %48 {strides = array<i32>} : memref<8x8x8xbf16, #tpu.memory_space<vmem>>, vector<1x8x8xbf16>,
    %49 = vector.extract_strided_slice %32 {offsets = [8, 32], sizes = [8, 8], strides = [1, 1]} : vector<16x96xbf16> to vector<8x8xbf16>
    %c1_26 = arith.constant 1 : index
    %c0_27 = arith.constant 0 : index
    %c0_28 = arith.constant 0 : index
    %50 = vector.load %arg16[%c1_26, %c0_27, %c0_28] : memref<8x8x8xbf16, #tpu.memory_space<vmem>>, vector<1x8x8xbf16>
    %51 = vector.shape_cast %50 : vector<1x8x8xbf16> to vector<8x8xbf16>
    %52 = vector.shape_cast %49 : vector<8x8xbf16> to vector<1x8x8xbf16>
    tpu.vector_store %arg16[%c1_26, %c0_27, %c0_28], %52 {strides = array<i32>} : memref<8x8x8xbf16, #tpu.memory_space<vmem>>, vector<1x8x8xbf16>,
    %53 = vector.extract_strided_slice %32 {offsets = [8, 64], sizes = [8, 8], strides = [1, 1]} : vector<16x96xbf16> to vector<8x8xbf16>
    %c1_29 = arith.constant 1 : index
    %c0_30 = arith.constant 0 : index
    %c0_31 = arith.constant 0 : index
    %54 = vector.load %arg17[%c1_29, %c0_30, %c0_31] : memref<8x8x8xbf16, #tpu.memory_space<vmem>>, vector<1x8x8xbf16>
    %55 = vector.shape_cast %54 : vector<1x8x8xbf16> to vector<8x8xbf16>
    %56 = vector.shape_cast %53 : vector<8x8xbf16> to vector<1x8x8xbf16>
    tpu.vector_store %arg17[%c1_29, %c0_30, %c0_31], %56 {strides = array<i32>} : memref<8x8x8xbf16, #tpu.memory_space<vmem>>, vector<1x8x8xbf16>,
    %57 = vector.extract_strided_slice %32 {offsets = [0, 8], sizes = [8, 8], strides = [1, 1]} : vector<16x96xbf16> to vector<8x8xbf16>
    %c2 = arith.constant 2 : index
    %c0_32 = arith.constant 0 : index
    %c0_33 = arith.constant 0 : index
    %58 = vector.load %arg15[%c2, %c0_32, %c0_33] : memref<8x8x8xbf16, #tpu.memory_space<vmem>>, vector<1x8x8xbf16>
    %59 = vector.shape_cast %58 : vector<1x8x8xbf16> to vector<8x8xbf16>
    %60 = vector.shape_cast %57 : vector<8x8xbf16> to vector<1x8x8xbf16>
    tpu.vector_store %arg15[%c2, %c0_32, %c0_33], %60 {strides = array<i32>} : memref<8x8x8xbf16, #tpu.memory_space<vmem>>, vector<1x8x8xbf16>,
    %61 = vector.extract_strided_slice %32 {offsets = [0, 40], sizes = [8, 8], strides = [1, 1]} : vector<16x96xbf16> to vector<8x8xbf16>
    %c2_34 = arith.constant 2 : index
    %c0_35 = arith.constant 0 : index
    %c0_36 = arith.constant 0 : index
    %62 = vector.load %arg16[%c2_34, %c0_35, %c0_36] : memref<8x8x8xbf16, #tpu.memory_space<vmem>>, vector<1x8x8xbf16>
    %63 = vector.shape_cast %62 : vector<1x8x8xbf16> to vector<8x8xbf16>
    %64 = vector.shape_cast %61 : vector<8x8xbf16> to vector<1x8x8xbf16>
    tpu.vector_store %arg16[%c2_34, %c0_35, %c0_36], %64 {strides = array<i32>} : memref<8x8x8xbf16, #tpu.memory_space<vmem>>, vector<1x8x8xbf16>,
    %65 = vector.extract_strided_slice %32 {offsets = [0, 72], sizes = [8, 8], strides = [1, 1]} : vector<16x96xbf16> to vector<8x8xbf16>
    %c2_37 = arith.constant 2 : index
    %c0_38 = arith.constant 0 : index
    %c0_39 = arith.constant 0 : index
    %66 = vector.load %arg17[%c2_37, %c0_38, %c0_39] : memref<8x8x8xbf16, #tpu.memory_space<vmem>>, vector<1x8x8xbf16>
    %67 = vector.shape_cast %66 : vector<1x8x8xbf16> to vector<8x8xbf16>
    %68 = vector.shape_cast %65 : vector<8x8xbf16> to vector<1x8x8xbf16>
    tpu.vector_store %arg17[%c2_37, %c0_38, %c0_39], %68 {strides = array<i32>} : memref<8x8x8xbf16, #tpu.memory_space<vmem>>, vector<1x8x8xbf16>,
    %69 = vector.extract_strided_slice %32 {offsets = [8, 8], sizes = [8, 8], strides = [1, 1]} : vector<16x96xbf16> to vector<8x8xbf16>
    %c3 = arith.constant 3 : index
    %c0_40 = arith.constant 0 : index
    %c0_41 = arith.constant 0 : index
    %70 = vector.load %arg15[%c3, %c0_40, %c0_41] : memref<8x8x8xbf16, #tpu.memory_space<vmem>>, vector<1x8x8xbf16>
    %71 = vector.shape_cast %70 : vector<1x8x8xbf16> to vector<8x8xbf16>
    %72 = vector.shape_cast %69 : vector<8x8xbf16> to vector<1x8x8xbf16>
    tpu.vector_store %arg15[%c3, %c0_40, %c0_41], %72 {strides = array<i32>} : memref<8x8x8xbf16, #tpu.memory_space<vmem>>, vector<1x8x8xbf16>,
    %73 = vector.extract_strided_slice %32 {offsets = [8, 40], sizes = [8, 8], strides = [1, 1]} : vector<16x96xbf16> to vector<8x8xbf16>
    %c3_42 = arith.constant 3 : index
    %c0_43 = arith.constant 0 : index
    %c0_44 = arith.constant 0 : index
    %74 = vector.load %arg16[%c3_42, %c0_43, %c0_44] : memref<8x8x8xbf16, #tpu.memory_space<vmem>>, vector<1x8x8xbf16>
    %75 = vector.shape_cast %74 : vector<1x8x8xbf16> to vector<8x8xbf16>
    %76 = vector.shape_cast %73 : vector<8x8xbf16> to vector<1x8x8xbf16>
    tpu.vector_store %arg16[%c3_42, %c0_43, %c0_44], %76 {strides = array<i32>} : memref<8x8x8xbf16, #tpu.memory_space<vmem>>, vector<1x8x8xbf16>,
    %77 = vector.extract_strided_slice %32 {offsets = [8, 72], sizes = [8, 8], strides = [1, 1]} : vector<16x96xbf16> to vector<8x8xbf16>
    %c3_45 = arith.constant 3 : index
    %c0_46 = arith.constant 0 : index
    %c0_47 = arith.constant 0 : index
    %78 = vector.load %arg17[%c3_45, %c0_46, %c0_47] : memref<8x8x8xbf16, #tpu.memory_space<vmem>>, vector<1x8x8xbf16>
    %79 = vector.shape_cast %78 : vector<1x8x8xbf16> to vector<8x8xbf16>
    %80 = vector.shape_cast %77 : vector<8x8xbf16> to vector<1x8x8xbf16>
    tpu.vector_store %arg17[%c3_45, %c0_46, %c0_47], %80 {strides = array<i32>} : memref<8x8x8xbf16, #tpu.memory_space<vmem>>, vector<1x8x8xbf16>,
    %81 = vector.extract_strided_slice %32 {offsets = [0, 16], sizes = [8, 8], strides = [1, 1]} : vector<16x96xbf16> to vector<8x8xbf16>
    %c4 = arith.constant 4 : index
    %c0_48 = arith.constant 0 : index
    %c0_49 = arith.constant 0 : index
    %82 = vector.load %arg15[%c4, %c0_48, %c0_49] : memref<8x8x8xbf16, #tpu.memory_space<vmem>>, vector<1x8x8xbf16>
    %83 = vector.shape_cast %82 : vector<1x8x8xbf16> to vector<8x8xbf16>
    %84 = vector.shape_cast %81 : vector<8x8xbf16> to vector<1x8x8xbf16>
    tpu.vector_store %arg15[%c4, %c0_48, %c0_49], %84 {strides = array<i32>} : memref<8x8x8xbf16, #tpu.memory_space<vmem>>, vector<1x8x8xbf16>,
    %85 = vector.extract_strided_slice %32 {offsets = [0, 48], sizes = [8, 8], strides = [1, 1]} : vector<16x96xbf16> to vector<8x8xbf16>
    %c4_50 = arith.constant 4 : index
    %c0_51 = arith.constant 0 : index
    %c0_52 = arith.constant 0 : index
    %86 = vector.load %arg16[%c4_50, %c0_51, %c0_52] : memref<8x8x8xbf16, #tpu.memory_space<vmem>>, vector<1x8x8xbf16>
    %87 = vector.shape_cast %86 : vector<1x8x8xbf16> to vector<8x8xbf16>
    %88 = vector.shape_cast %85 : vector<8x8xbf16> to vector<1x8x8xbf16>
    tpu.vector_store %arg16[%c4_50, %c0_51, %c0_52], %88 {strides = array<i32>} : memref<8x8x8xbf16, #tpu.memory_space<vmem>>, vector<1x8x8xbf16>,
    %89 = vector.extract_strided_slice %32 {offsets = [0, 80], sizes = [8, 8], strides = [1, 1]} : vector<16x96xbf16> to vector<8x8xbf16>
    %c4_53 = arith.constant 4 : index
    %c0_54 = arith.constant 0 : index
    %c0_55 = arith.constant 0 : index
    %90 = vector.load %arg17[%c4_53, %c0_54, %c0_55] : memref<8x8x8xbf16, #tpu.memory_space<vmem>>, vector<1x8x8xbf16>
    %91 = vector.shape_cast %90 : vector<1x8x8xbf16> to vector<8x8xbf16>
    %92 = vector.shape_cast %89 : vector<8x8xbf16> to vector<1x8x8xbf16>
    tpu.vector_store %arg17[%c4_53, %c0_54, %c0_55], %92 {strides = array<i32>} : memref<8x8x8xbf16, #tpu.memory_space<vmem>>, vector<1x8x8xbf16>,
    %93 = vector.extract_strided_slice %32 {offsets = [8, 16], sizes = [8, 8], strides = [1, 1]} : vector<16x96xbf16> to vector<8x8xbf16>
    %c5 = arith.constant 5 : index
    %c0_56 = arith.constant 0 : index
    %c0_57 = arith.constant 0 : index
    %94 = vector.load %arg15[%c5, %c0_56, %c0_57] : memref<8x8x8xbf16, #tpu.memory_space<vmem>>, vector<1x8x8xbf16>
    %95 = vector.shape_cast %94 : vector<1x8x8xbf16> to vector<8x8xbf16>
    %96 = vector.shape_cast %93 : vector<8x8xbf16> to vector<1x8x8xbf16>
    tpu.vector_store %arg15[%c5, %c0_56, %c0_57], %96 {strides = array<i32>} : memref<8x8x8xbf16, #tpu.memory_space<vmem>>, vector<1x8x8xbf16>,
    %97 = vector.extract_strided_slice %32 {offsets = [8, 48], sizes = [8, 8], strides = [1, 1]} : vector<16x96xbf16> to vector<8x8xbf16>
    %c5_58 = arith.constant 5 : index
    %c0_59 = arith.constant 0 : index
    %c0_60 = arith.constant 0 : index
    %98 = vector.load %arg16[%c5_58, %c0_59, %c0_60] : memref<8x8x8xbf16, #tpu.memory_space<vmem>>, vector<1x8x8xbf16>
    %99 = vector.shape_cast %98 : vector<1x8x8xbf16> to vector<8x8xbf16>
    %100 = vector.shape_cast %97 : vector<8x8xbf16> to vector<1x8x8xbf16>
    tpu.vector_store %arg16[%c5_58, %c0_59, %c0_60], %100 {strides = array<i32>} : memref<8x8x8xbf16, #tpu.memory_space<vmem>>, vector<1x8x8xbf16>,
    %101 = vector.extract_strided_slice %32 {offsets = [8, 80], sizes = [8, 8], strides = [1, 1]} : vector<16x96xbf16> to vector<8x8xbf16>
    %c5_61 = arith.constant 5 : index
    %c0_62 = arith.constant 0 : index
    %c0_63 = arith.constant 0 : index
    %102 = vector.load %arg17[%c5_61, %c0_62, %c0_63] : memref<8x8x8xbf16, #tpu.memory_space<vmem>>, vector<1x8x8xbf16>
    %103 = vector.shape_cast %102 : vector<1x8x8xbf16> to vector<8x8xbf16>
    %104 = vector.shape_cast %101 : vector<8x8xbf16> to vector<1x8x8xbf16>
    tpu.vector_store %arg17[%c5_61, %c0_62, %c0_63], %104 {strides = array<i32>} : memref<8x8x8xbf16, #tpu.memory_space<vmem>>, vector<1x8x8xbf16>,
    %105 = vector.extract_strided_slice %32 {offsets = [0, 24], sizes = [8, 8], strides = [1, 1]} : vector<16x96xbf16> to vector<8x8xbf16>
    %c6 = arith.constant 6 : index
    %c0_64 = arith.constant 0 : index
    %c0_65 = arith.constant 0 : index
    %106 = vector.load %arg15[%c6, %c0_64, %c0_65] : memref<8x8x8xbf16, #tpu.memory_space<vmem>>, vector<1x8x8xbf16>
    %107 = vector.shape_cast %106 : vector<1x8x8xbf16> to vector<8x8xbf16>
    %108 = vector.shape_cast %105 : vector<8x8xbf16> to vector<1x8x8xbf16>
    tpu.vector_store %arg15[%c6, %c0_64, %c0_65], %108 {strides = array<i32>} : memref<8x8x8xbf16, #tpu.memory_space<vmem>>, vector<1x8x8xbf16>,
    %109 = vector.extract_strided_slice %32 {offsets = [0, 56], sizes = [8, 8], strides = [1, 1]} : vector<16x96xbf16> to vector<8x8xbf16>
    %c6_66 = arith.constant 6 : index
    %c0_67 = arith.constant 0 : index
    %c0_68 = arith.constant 0 : index
    %110 = vector.load %arg16[%c6_66, %c0_67, %c0_68] : memref<8x8x8xbf16, #tpu.memory_space<vmem>>, vector<1x8x8xbf16>
    %111 = vector.shape_cast %110 : vector<1x8x8xbf16> to vector<8x8xbf16>
    %112 = vector.shape_cast %109 : vector<8x8xbf16> to vector<1x8x8xbf16>
    tpu.vector_store %arg16[%c6_66, %c0_67, %c0_68], %112 {strides = array<i32>} : memref<8x8x8xbf16, #tpu.memory_space<vmem>>, vector<1x8x8xbf16>,
    %113 = vector.extract_strided_slice %32 {offsets = [0, 88], sizes = [8, 8], strides = [1, 1]} : vector<16x96xbf16> to vector<8x8xbf16>
    %c6_69 = arith.constant 6 : index
    %c0_70 = arith.constant 0 : index
    %c0_71 = arith.constant 0 : index
    %114 = vector.load %arg17[%c6_69, %c0_70, %c0_71] : memref<8x8x8xbf16, #tpu.memory_space<vmem>>, vector<1x8x8xbf16>
    %115 = vector.shape_cast %114 : vector<1x8x8xbf16> to vector<8x8xbf16>
    %116 = vector.shape_cast %113 : vector<8x8xbf16> to vector<1x8x8xbf16>
    tpu.vector_store %arg17[%c6_69, %c0_70, %c0_71], %116 {strides = array<i32>} : memref<8x8x8xbf16, #tpu.memory_space<vmem>>, vector<1x8x8xbf16>,
    %117 = vector.extract_strided_slice %32 {offsets = [8, 24], sizes = [8, 8], strides = [1, 1]} : vector<16x96xbf16> to vector<8x8xbf16>
    %c7 = arith.constant 7 : index
    %c0_72 = arith.constant 0 : index
    %c0_73 = arith.constant 0 : index
    %118 = vector.load %arg15[%c7, %c0_72, %c0_73] : memref<8x8x8xbf16, #tpu.memory_space<vmem>>, vector<1x8x8xbf16>
    %119 = vector.shape_cast %118 : vector<1x8x8xbf16> to vector<8x8xbf16>
    %120 = vector.shape_cast %117 : vector<8x8xbf16> to vector<1x8x8xbf16>
    tpu.vector_store %arg15[%c7, %c0_72, %c0_73], %120 {strides = array<i32>} : memref<8x8x8xbf16, #tpu.memory_space<vmem>>, vector<1x8x8xbf16>,
    %121 = vector.extract_strided_slice %32 {offsets = [8, 56], sizes = [8, 8], strides = [1, 1]} : vector<16x96xbf16> to vector<8x8xbf16>
    %c7_74 = arith.constant 7 : index
    %c0_75 = arith.constant 0 : index
    %c0_76 = arith.constant 0 : index
    %122 = vector.load %arg16[%c7_74, %c0_75, %c0_76] : memref<8x8x8xbf16, #tpu.memory_space<vmem>>, vector<1x8x8xbf16>
    %123 = vector.shape_cast %122 : vector<1x8x8xbf16> to vector<8x8xbf16>
    %124 = vector.shape_cast %121 : vector<8x8xbf16> to vector<1x8x8xbf16>
    tpu.vector_store %arg16[%c7_74, %c0_75, %c0_76], %124 {strides = array<i32>} : memref<8x8x8xbf16, #tpu.memory_space<vmem>>, vector<1x8x8xbf16>,
    %125 = vector.extract_strided_slice %32 {offsets = [8, 88], sizes = [8, 8], strides = [1, 1]} : vector<16x96xbf16> to vector<8x8xbf16>
    %c7_77 = arith.constant 7 : index
    %c0_78 = arith.constant 0 : index
    %c0_79 = arith.constant 0 : index
    %126 = vector.load %arg17[%c7_77, %c0_78, %c0_79] : memref<8x8x8xbf16, #tpu.memory_space<vmem>>, vector<1x8x8xbf16>
    %127 = vector.shape_cast %126 : vector<1x8x8xbf16> to vector<8x8xbf16>
    %128 = vector.shape_cast %125 : vector<8x8xbf16> to vector<1x8x8xbf16>
    tpu.vector_store %arg17[%c7_77, %c0_78, %c0_79], %128 {strides = array<i32>} : memref<8x8x8xbf16, #tpu.memory_space<vmem>>, vector<1x8x8xbf16>,
    %c0_80 = arith.constant 0 : index
    %c0_81 = arith.constant 0 : index
    %c0_82 = arith.constant 0 : index
    %129 = vector.load %arg15[%c0_80, %c0_81, %c0_82] : memref<8x8x8xbf16, #tpu.memory_space<vmem>>, vector<8x8x8xbf16>
    %c0_83 = arith.constant 0 : index
    %c0_84 = arith.constant 0 : index
    %c0_85 = arith.constant 0 : index
    %130 = vector.load %arg16[%c0_83, %c0_84, %c0_85] : memref<8x8x8xbf16, #tpu.memory_space<vmem>>, vector<8x8x8xbf16>
    "tpu.trace_start"() <{level = 10 : i32, message = "bqd,bkd->bqk"}> : () -> ()
    %cst_86 = arith.constant dense<0.000000e+00> : vector<8x8x8xf32>
    %131 = tpu.matmul %129, %130, %cst_86 {dimension_numbers = #tpu.dot_dimension_numbers<[2], [2], [1], [1], [0, 0, 0, 1, 1, 1], [0], [0]>} : vector<8x8x8xbf16>, vector<8x8x8xbf16>, vector<8x8x8xf32> -> vector<8x8x8xf32>
    "tpu.trace_stop"() : () -> ()
    %cst_87 = arith.constant dense<0xFF800000> : vector<8x8xf32>
    %132 = vector.multi_reduction <maximumf>, %131, %cst_87 [2] : vector<8x8x8xf32> to vector<8x8xf32>
    %133 = vector.shape_cast %132 : vector<8x8xf32> to vector<8x8x1xf32>
    %134 = vector.broadcast %133 : vector<8x8x1xf32> to vector<8x8x8xf32>
    %135 = arith.subf %131, %134 : vector<8x8x8xf32>
    %136 = math.exp %135 : vector<8x8x8xf32>
    %cst_88 = arith.constant dense<0.000000e+00> : vector<8x8xf32>
    %137 = vector.multi_reduction <add>, %136, %cst_88 [2] : vector<8x8x8xf32> to vector<8x8xf32>
    %138 = vector.shape_cast %137 : vector<8x8xf32> to vector<8x8x1xf32>
    %139 = arith.truncf %136 : vector<8x8x8xf32> to vector<8x8x8xbf16>
    %c0_89 = arith.constant 0 : index
    %c0_90 = arith.constant 0 : index
    %c0_91 = arith.constant 0 : index
    %140 = vector.load %arg17[%c0_89, %c0_90, %c0_91] : memref<8x8x8xbf16, #tpu.memory_space<vmem>>, vector<8x8x8xbf16>
    "tpu.trace_start"() <{level = 10 : i32, message = "bqk,bkd->bqd"}> : () -> ()
    %cst_92 = arith.constant dense<0.000000e+00> : vector<8x8x8xf32>
    %141 = tpu.matmul %139, %140, %cst_92 {dimension_numbers = #tpu.dot_dimension_numbers<[2], [1], [1], [2], [0, 0, 0, 1, 1, 2], [0], [0]>} : vector<8x8x8xbf16>, vector<8x8x8xbf16>, vector<8x8x8xf32> -> vector<8x8x8xf32>
    "tpu.trace_stop"() : () -> ()
    %142 = tpu.reciprocal %138 {approx = true} : vector<8x8x1xf32> -> vector<8x8x1xf32>
    %143 = vector.broadcast %142 : vector<8x8x1xf32> to vector<8x8x8xf32>
    %144 = arith.mulf %141, %143 : vector<8x8x8xf32>
    %145 = arith.truncf %144 : vector<8x8x8xf32> to vector<8x8x8xbf16>
    %146 = vector.extract_strided_slice %145 {offsets = [0, 0, 0], sizes = [1, 8, 8], strides = [1, 1, 1]} : vector<8x8x8xbf16> to vector<1x8x8xbf16>
    %147 = vector.shape_cast %146 : vector<1x8x8xbf16> to vector<8x8xbf16>
    %c0_93 = arith.constant 0 : index
    %c0_94 = arith.constant 0 : index
    %148 = vector.load %arg18[%c0_93, %c0_94] : memref<16x32xbf16, #tpu.memory_space<vmem>>, vector<8x8xbf16>
    tpu.vector_store %arg18[%c0_93, %c0_94], %147 {strides = array<i32>} : memref<16x32xbf16, #tpu.memory_space<vmem>>, vector<8x8xbf16>,
    %149 = vector.extract_strided_slice %145 {offsets = [1, 0, 0], sizes = [1, 8, 8], strides = [1, 1, 1]} : vector<8x8x8xbf16> to vector<1x8x8xbf16>
    %150 = vector.shape_cast %149 : vector<1x8x8xbf16> to vector<8x8xbf16>
    %c8 = arith.constant 8 : index
    %c0_95 = arith.constant 0 : index
    %151 = vector.load %arg18[%c8, %c0_95] : memref<16x32xbf16, #tpu.memory_space<vmem>>, vector<8x8xbf16>
    tpu.vector_store %arg18[%c8, %c0_95], %150 {strides = array<i32>} : memref<16x32xbf16, #tpu.memory_space<vmem>>, vector<8x8xbf16>,
    %152 = vector.extract_strided_slice %145 {offsets = [2, 0, 0], sizes = [1, 8, 8], strides = [1, 1, 1]} : vector<8x8x8xbf16> to vector<1x8x8xbf16>
    %153 = vector.shape_cast %152 : vector<1x8x8xbf16> to vector<8x8xbf16>
    %c0_96 = arith.constant 0 : index
    %c8_97 = arith.constant 8 : index
    %154 = vector.load %arg18[%c0_96, %c8_97] : memref<16x32xbf16, #tpu.memory_space<vmem>>, vector<8x8xbf16>
    tpu.vector_store %arg18[%c0_96, %c8_97], %153 {strides = array<i32>} : memref<16x32xbf16, #tpu.memory_space<vmem>>, vector<8x8xbf16>,
    %155 = vector.extract_strided_slice %145 {offsets = [3, 0, 0], sizes = [1, 8, 8], strides = [1, 1, 1]} : vector<8x8x8xbf16> to vector<1x8x8xbf16>
    %156 = vector.shape_cast %155 : vector<1x8x8xbf16> to vector<8x8xbf16>
    %c8_98 = arith.constant 8 : index
    %c8_99 = arith.constant 8 : index
    %157 = vector.load %arg18[%c8_98, %c8_99] : memref<16x32xbf16, #tpu.memory_space<vmem>>, vector<8x8xbf16>
    tpu.vector_store %arg18[%c8_98, %c8_99], %156 {strides = array<i32>} : memref<16x32xbf16, #tpu.memory_space<vmem>>, vector<8x8xbf16>,
    %158 = vector.extract_strided_slice %145 {offsets = [4, 0, 0], sizes = [1, 8, 8], strides = [1, 1, 1]} : vector<8x8x8xbf16> to vector<1x8x8xbf16>
    %159 = vector.shape_cast %158 : vector<1x8x8xbf16> to vector<8x8xbf16>
    %c0_100 = arith.constant 0 : index
    %c16 = arith.constant 16 : index
    %160 = vector.load %arg18[%c0_100, %c16] : memref<16x32xbf16, #tpu.memory_space<vmem>>, vector<8x8xbf16>
    tpu.vector_store %arg18[%c0_100, %c16], %159 {strides = array<i32>} : memref<16x32xbf16, #tpu.memory_space<vmem>>, vector<8x8xbf16>,
    %161 = vector.extract_strided_slice %145 {offsets = [5, 0, 0], sizes = [1, 8, 8], strides = [1, 1, 1]} : vector<8x8x8xbf16> to vector<1x8x8xbf16>
    %162 = vector.shape_cast %161 : vector<1x8x8xbf16> to vector<8x8xbf16>
    %c8_101 = arith.constant 8 : index
    %c16_102 = arith.constant 16 : index
    %163 = vector.load %arg18[%c8_101, %c16_102] : memref<16x32xbf16, #tpu.memory_space<vmem>>, vector<8x8xbf16>
    tpu.vector_store %arg18[%c8_101, %c16_102], %162 {strides = array<i32>} : memref<16x32xbf16, #tpu.memory_space<vmem>>, vector<8x8xbf16>,
    %164 = vector.extract_strided_slice %145 {offsets = [6, 0, 0], sizes = [1, 8, 8], strides = [1, 1, 1]} : vector<8x8x8xbf16> to vector<1x8x8xbf16>
    %165 = vector.shape_cast %164 : vector<1x8x8xbf16> to vector<8x8xbf16>
    %c0_103 = arith.constant 0 : index
    %c24 = arith.constant 24 : index
    %166 = vector.load %arg18[%c0_103, %c24] : memref<16x32xbf16, #tpu.memory_space<vmem>>, vector<8x8xbf16>
    tpu.vector_store %arg18[%c0_103, %c24], %165 {strides = array<i32>} : memref<16x32xbf16, #tpu.memory_space<vmem>>, vector<8x8xbf16>,
    %167 = vector.extract_strided_slice %145 {offsets = [7, 0, 0], sizes = [1, 8, 8], strides = [1, 1, 1]} : vector<8x8x8xbf16> to vector<1x8x8xbf16>
    %168 = vector.shape_cast %167 : vector<1x8x8xbf16> to vector<8x8xbf16>
    %c8_104 = arith.constant 8 : index
    %c24_105 = arith.constant 24 : index
    %169 = vector.load %arg18[%c8_104, %c24_105] : memref<16x32xbf16, #tpu.memory_space<vmem>>, vector<8x8xbf16>
    tpu.vector_store %arg18[%c8_104, %c24_105], %168 {strides = array<i32>} : memref<16x32xbf16, #tpu.memory_space<vmem>>, vector<8x8xbf16>,
    %c0_106 = arith.constant 0 : index
    %c0_107 = arith.constant 0 : index
    %170 = vector.load %arg18[%c0_106, %c0_107] : memref<16x32xbf16, #tpu.memory_space<vmem>>, vector<16x32xbf16>
    %c0_108 = arith.constant 0 : index
    %c0_109 = arith.constant 0 : index
    %171 = vector.load %arg4[%c0_108, %c0_109] : memref<32x32xbf16, #tpu.memory_space<vmem>>, vector<32x32xbf16>
    %cst_110 = arith.constant dense<0.000000e+00> : vector<16x32xf32>
    %172 = tpu.matmul %170, %171, %cst_110 {dimension_numbers = #tpu.dot_dimension_numbers<[1], [0], [0], [1], [0, 0, 1, 1], [], []>} : vector<16x32xbf16>, vector<32x32xbf16>, vector<16x32xf32> -> vector<16x32xf32>
    %c0_111 = arith.constant 0 : index
    %c0_112 = arith.constant 0 : index
    %173 = vector.load %arg5[%c0_111, %c0_112] : memref<1x32xf32, #tpu.memory_space<vmem>>, vector<1x32xf32>
    %174 = vector.broadcast %173 : vector<1x32xf32> to vector<16x32xf32>
    %175 = arith.addf %172, %174 : vector<16x32xf32>
    %176 = arith.addf %1, %175 : vector<16x32xf32>
    %c0_113 = arith.constant 0 : index
    %c0_114 = arith.constant 0 : index
    %177 = vector.load %arg8[%c0_113, %c0_114] : memref<1x32xf32, #tpu.memory_space<vmem>>, vector<1x32xf32>
    %c0_115 = arith.constant 0 : index
    %c0_116 = arith.constant 0 : index
    %178 = vector.load %arg9[%c0_115, %c0_116] : memref<1x32xf32, #tpu.memory_space<vmem>>, vector<1x32xf32>
    %cst_117 = arith.constant dense<0.000000e+00> : vector<16xf32>
    %179 = vector.multi_reduction <add>, %176, %cst_117 [1] : vector<16x32xf32> to vector<16xf32>
    %180 = vector.shape_cast %179 : vector<16xf32> to vector<16x1xf32>
    %cst_118 = arith.constant 3.200000e+01 : f32
    %181 = vector.broadcast %cst_118 : f32 to vector<16x1xf32>
    %182 = arith.divf %180, %181 : vector<16x1xf32>
    %183 = vector.broadcast %182 : vector<16x1xf32> to vector<16x32xf32>
    %184 = arith.subf %176, %183 : vector<16x32xf32>
    %185 = arith.mulf %184, %184 : vector<16x32xf32>
    %cst_119 = arith.constant dense<0.000000e+00> : vector<16xf32>
    %186 = vector.multi_reduction <add>, %185, %cst_119 [1] : vector<16x32xf32> to vector<16xf32>
    %187 = vector.shape_cast %186 : vector<16xf32> to vector<16x1xf32>
    %cst_120 = arith.constant 3.200000e+01 : f32
    %188 = vector.broadcast %cst_120 : f32 to vector<16x1xf32>
    %189 = arith.divf %187, %188 : vector<16x1xf32>
    %190 = vector.broadcast %182 : vector<16x1xf32> to vector<16x32xf32>
    %191 = arith.subf %176, %190 : vector<16x32xf32>
    %cst_121 = arith.constant 9.99999974E-6 : f32
    %192 = vector.broadcast %cst_121 : f32 to vector<16x1xf32>
    %193 = arith.addf %189, %192 : vector<16x1xf32>
    %194 = math.rsqrt %193 : vector<16x1xf32>
    %195 = vector.broadcast %194 : vector<16x1xf32> to vector<16x32xf32>
    %196 = arith.mulf %191, %195 : vector<16x32xf32>
    %197 = vector.broadcast %177 : vector<1x32xf32> to vector<16x32xf32>
    %198 = arith.mulf %196, %197 : vector<16x32xf32>
    %199 = vector.broadcast %178 : vector<1x32xf32> to vector<16x32xf32>
    %200 = arith.addf %198, %199 : vector<16x32xf32>
    %201 = arith.truncf %200 : vector<16x32xf32> to vector<16x32xbf16>
    %c0_122 = arith.constant 0 : index
    %c0_123 = arith.constant 0 : index
    %202 = vector.load %arg10[%c0_122, %c0_123] : memref<32x128xbf16, #tpu.memory_space<vmem>>, vector<32x128xbf16>
    %cst_124 = arith.constant dense<0.000000e+00> : vector<16x128xf32>
    %203 = tpu.matmul %201, %202, %cst_124 {dimension_numbers = #tpu.dot_dimension_numbers<[1], [0], [0], [1], [0, 0, 1, 1], [], []>} : vector<16x32xbf16>, vector<32x128xbf16>, vector<16x128xf32> -> vector<16x128xf32>
    %c0_125 = arith.constant 0 : index
    %c0_126 = arith.constant 0 : index
    %204 = vector.load %arg11[%c0_125, %c0_126] : memref<1x128xf32, #tpu.memory_space<vmem>>, vector<1x128xf32>
    %205 = vector.broadcast %204 : vector<1x128xf32> to vector<16x128xf32>
    %206 = arith.addf %203, %205 : vector<16x128xf32>
    %cst_127 = arith.constant 1.702000e+00 : f32
    %207 = vector.broadcast %cst_127 : f32 to vector<16x128xf32>
    %208 = arith.mulf %207, %206 : vector<16x128xf32>
    %209 = arith.negf %208 : vector<16x128xf32>
    %210 = math.exp %209 : vector<16x128xf32>
    %cst_128 = arith.constant 1.000000e+00 : f32
    %211 = vector.broadcast %cst_128 : f32 to vector<16x128xf32>
    %212 = arith.addf %211, %210 : vector<16x128xf32>
    %213 = arith.divf %211, %212 : vector<16x128xf32>
    %214 = arith.mulf %206, %213 : vector<16x128xf32>
    %215 = arith.truncf %214 : vector<16x128xf32> to vector<16x128xbf16>
    %c0_129 = arith.constant 0 : index
    %c0_130 = arith.constant 0 : index
    %216 = vector.load %arg12[%c0_129, %c0_130] : memref<128x32xbf16, #tpu.memory_space<vmem>>, vector<128x32xbf16>
    %cst_131 = arith.constant dense<0.000000e+00> : vector<16x32xf32>
    %217 = tpu.matmul %215, %216, %cst_131 {dimension_numbers = #tpu.dot_dimension_numbers<[1], [0], [0], [1], [0, 0, 1, 1], [], []>} : vector<16x128xbf16>, vector<128x32xbf16>, vector<16x32xf32> -> vector<16x32xf32>
    %218 = arith.addf %176, %217 : vector<16x32xf32>
    %c0_132 = arith.constant 0 : index
    %c0_133 = arith.constant 0 : index
    %219 = vector.load %arg13[%c0_132, %c0_133] : memref<1x32xf32, #tpu.memory_space<vmem>>, vector<1x32xf32>
    %220 = vector.broadcast %219 : vector<1x32xf32> to vector<16x32xf32>
    %221 = arith.addf %218, %220 : vector<16x32xf32>
    %222 = vector.shape_cast %221 : vector<16x32xf32> to vector<2x8x32xf32>
    %c0_134 = arith.constant 0 : index
    %c0_135 = arith.constant 0 : index
    %c0_136 = arith.constant 0 : index
    %223 = vector.load %arg14[%c0_134, %c0_135, %c0_136] : memref<2x8x32xf32, #tpu.memory_space<vmem>>, vector<2x8x32xf32>
    tpu.vector_store %arg14[%c0_134, %c0_135, %c0_136], %222 {strides = array<i32>} : memref<2x8x32xf32, #tpu.memory_space<vmem>>, vector<2x8x32xf32>,
    return
  }
  func.func @transform_0(%arg0: i32) -> (i32, i32, i32) {
    %c0_i32 = arith.constant 0 : i32
    %c0_i32_0 = arith.constant 0 : i32
    %c0_i32_1 = arith.constant 0 : i32
    return %arg0, %c0_i32, %c0_i32_0 : i32, i32, i32
  }
  func.func @transform_1(%arg0: i32) -> (i32, i32) {
    %c0_i32 = arith.constant 0 : i32
    %c0_i32_0 = arith.constant 0 : i32
    %c0_i32_1 = arith.constant 0 : i32
    return %c0_i32, %c0_i32_0 : i32, i32
  }
  func.func @transform_2(%arg0: i32) -> (i32, i32) {
    %c0_i32 = arith.constant 0 : i32
    %c0_i32_0 = arith.constant 0 : i32
    %c0_i32_1 = arith.constant 0 : i32
    return %c0_i32, %c0_i32_0 : i32, i32
  }
  func.func @transform_3(%arg0: i32) -> (i32, i32) {
    %c0_i32 = arith.constant 0 : i32
    %c0_i32_0 = arith.constant 0 : i32
    %c0_i32_1 = arith.constant 0 : i32
    return %c0_i32, %c0_i32_0 : i32, i32
  }
  func.func @transform_4(%arg0: i32) -> (i32, i32) {
    %c0_i32 = arith.constant 0 : i32
    %c0_i32_0 = arith.constant 0 : i32
    %c0_i32_1 = arith.constant 0 : i32
    return %c0_i32, %c0_i32_0 : i32, i32
  }
  func.func @transform_5(%arg0: i32) -> (i32, i32) {
    %c0_i32 = arith.constant 0 : i32
    %c0_i32_0 = arith.constant 0 : i32
    %c0_i32_1 = arith.constant 0 : i32
    return %c0_i32, %c0_i32_0 : i32, i32
  }
  func.func @transform_6(%arg0: i32) -> (i32, i32) {
    %c0_i32 = arith.constant 0 : i32
    %c0_i32_0 = arith.constant 0 : i32
    %c0_i32_1 = arith.constant 0 : i32
    return %c0_i32, %c0_i32_0 : i32, i32
  }
  func.func @transform_7(%arg0: i32) -> (i32, i32) {
    %c0_i32 = arith.constant 0 : i32
    %c0_i32_0 = arith.constant 0 : i32
    %c0_i32_1 = arith.constant 0 : i32
    return %c0_i32, %c0_i32_0 : i32, i32
  }
  func.func @transform_8(%arg0: i32) -> (i32, i32) {
    %c0_i32 = arith.constant 0 : i32
    %c0_i32_0 = arith.constant 0 : i32
    %c0_i32_1 = arith.constant 0 : i32
    return %c0_i32, %c0_i32_0 : i32, i32
  }
  func.func @transform_9(%arg0: i32) -> (i32, i32) {
    %c0_i32 = arith.constant 0 : i32
    %c0_i32_0 = arith.constant 0 : i32
    %c0_i32_1 = arith.constant 0 : i32
    return %c0_i32, %c0_i32_0 : i32, i32
  }
  func.func @transform_10(%arg0: i32) -> (i32, i32) {
    %c0_i32 = arith.constant 0 : i32
    %c0_i32_0 = arith.constant 0 : i32
    %c0_i32_1 = arith.constant 0 : i32
    return %c0_i32, %c0_i32_0 : i32, i32
  }
  func.func @transform_11(%arg0: i32) -> (i32, i32) {
    %c0_i32 = arith.constant 0 : i32
    %c0_i32_0 = arith.constant 0 : i32
    %c0_i32_1 = arith.constant 0 : i32
    return %c0_i32, %c0_i32_0 : i32, i32
  }
  func.func @transform_12(%arg0: i32) -> (i32, i32) {
    %c0_i32 = arith.constant 0 : i32
    %c0_i32_0 = arith.constant 0 : i32
    %c0_i32_1 = arith.constant 0 : i32
    return %c0_i32, %c0_i32_0 : i32, i32
  }
  func.func @transform_13(%arg0: i32) -> (i32, i32, i32) {
    %c0_i32 = arith.constant 0 : i32
    %c0_i32_0 = arith.constant 0 : i32
    %c0_i32_1 = arith.constant 0 : i32
    return %arg0, %c0_i32, %c0_i32_0 : i32, i32, i32
  }
}

</mosaic_0001>

<llo_original>
// kernel: tpu_custom_call.1
$region0: #{tpu_custom_call.1}
  #allocation0 [shape = 'u32[]', space=smem, size = 0x4, offset = 0x4, fixed_abs, tag = 'smem constant byte address 0x4 - core index']
  #allocation1 [shape = 'u32[144,128]{1,0:T(1,128)}', space=vmem, size = 0x12000, scoped, tag = 'internal scratch']
  #allocation2 [shape = 'bf16[8,8,8]{2,1,0:T(8,128)(2,1)}', space=vmem, size = 0x4000, scoped, tag = 'scratch operand']
  #allocation3 [shape = 'bf16[8,8,8]{2,1,0:T(8,128)(2,1)}', space=vmem, size = 0x4000, scoped, tag = 'scratch operand']
  #allocation4 [shape = 'bf16[8,8,8]{2,1,0:T(8,128)(2,1)}', space=vmem, size = 0x4000, scoped, tag = 'scratch operand']
  #allocation5 [shape = 'bf16[16,32]{1,0:T(16,128)(2,1)}', space=vmem, size = 0x1000, scoped, tag = 'scratch operand']
  %s0 = inlined_call_operand.vmem [shape: f32[2,8,32], index: 0, kind: input, shape index: {}]
  %s1 = inlined_call_operand.vmem [shape: bf16[32,96], index: 1, kind: input, shape index: {}]
  %s2 = inlined_call_operand.vmem [shape: f32[1,96], index: 2, kind: input, shape index: {}]
  %s3 = inlined_call_operand.vmem [shape: bf16[32,32], index: 3, kind: input, shape index: {}]
  %s4 = inlined_call_operand.vmem [shape: f32[1,32], index: 4, kind: input, shape index: {}]
  %s5 = inlined_call_operand.vmem [shape: f32[1,32], index: 5, kind: input, shape index: {}]
  %s6 = inlined_call_operand.vmem [shape: f32[1,32], index: 6, kind: input, shape index: {}]
  %s7 = inlined_call_operand.vmem [shape: f32[1,32], index: 7, kind: input, shape index: {}]
  %s8 = inlined_call_operand.vmem [shape: f32[1,32], index: 8, kind: input, shape index: {}]
  %s9 = inlined_call_operand.vmem [shape: bf16[32,128], index: 9, kind: input, shape index: {}]
  %s10 = inlined_call_operand.vmem [shape: f32[1,128], index: 10, kind: input, shape index: {}]
  %s11 = inlined_call_operand.vmem [shape: bf16[128,32], index: 11, kind: input, shape index: {}]
  %s12 = inlined_call_operand.vmem [shape: f32[1,32], index: 12, kind: input, shape index: {}]
  %s13 = inlined_call_operand.hbm [shape: f32[2,8,32], index: 13, kind: output, shape index: {}]
  %s14 = sld [smem:[#allocation0]]
  $region62: #{tpu_custom_call.1} parent=0
    _
  %s16 = ssub.s32 1, %s14
  %s17 = scalar_select 0, %s16, %s14
  $region1: #{tpu_custom_call.1} parent=0
    #allocation6 [shape = 'u8[8192]{0}', space=vmem, size = 0x2000, scoped, tag = 'output window, operand 0, single buffered']
    #allocation7 [shape = 's32[1]{0}', space=sflag, size = 0x4, scoped, tag = 'scoped memory for tpu_custom_call.1']
    %18 = vsyncpa [#allocation7], 0
    // Predicated region
    $region2: #{tpu_custom_call.1} parent=1 // pred_check
      _
    $region3: #{tpu_custom_call.1} parent=1 // pred_check_branch
      %20 = sbr.rel (0) target = $region5
    $region4: #{tpu_custom_call.1} parent=1 // pred_region
      _
    $region5: #{tpu_custom_call.1} parent=1 // pred_fallthru
      _
    // Predicated region
    $region6: #{tpu_custom_call.1} parent=1 // pred_check
      _
    $region7: #{tpu_custom_call.1} parent=1 // pred_check_branch
      %22 = sbr.rel (0) target = $region9
    $region8: #{tpu_custom_call.1} parent=1 // pred_region
      _
    $region9: #{tpu_custom_call.1} parent=1 // pred_fallthru
      _
    // Predicated region
    $region10: #{tpu_custom_call.1} parent=1 // pred_check
      _
    $region11: #{tpu_custom_call.1} parent=1 // pred_check_branch
      %24 = sbr.rel (0) target = $region13
    $region12: #{tpu_custom_call.1} parent=1 // pred_region
      _
    $region13: #{tpu_custom_call.1} parent=1 // pred_fallthru
      _
    // Predicated region
    $region14: #{tpu_custom_call.1} parent=1 // pred_check
      _
    $region15: #{tpu_custom_call.1} parent=1 // pred_check_branch
      %26 = sbr.rel (0) target = $region17
    $region16: #{tpu_custom_call.1} parent=1 // pred_region
      _
    $region17: #{tpu_custom_call.1} parent=1 // pred_fallthru
      _
    // Predicated region
    $region18: #{tpu_custom_call.1} parent=1 // pred_check
      _
    $region19: #{tpu_custom_call.1} parent=1 // pred_check_branch
      %28 = sbr.rel (0) target = $region21
    $region20: #{tpu_custom_call.1} parent=1 // pred_region
      _
    $region21: #{tpu_custom_call.1} parent=1 // pred_fallthru
      _
    // Predicated region
    $region22: #{tpu_custom_call.1} parent=1 // pred_check
      _
    $region23: #{tpu_custom_call.1} parent=1 // pred_check_branch
      %30 = sbr.rel (0) target = $region25
    $region24: #{tpu_custom_call.1} parent=1 // pred_region
      _
    $region25: #{tpu_custom_call.1} parent=1 // pred_fallthru
      _
    // Predicated region
    $region26: #{tpu_custom_call.1} parent=1 // pred_check
      _
    $region27: #{tpu_custom_call.1} parent=1 // pred_check_branch
      %32 = sbr.rel (0) target = $region29
    $region28: #{tpu_custom_call.1} parent=1 // pred_region
      _
    $region29: #{tpu_custom_call.1} parent=1 // pred_fallthru
      _
    // Predicated region
    $region30: #{tpu_custom_call.1} parent=1 // pred_check
      _
    $region31: #{tpu_custom_call.1} parent=1 // pred_check_branch
      %34 = sbr.rel (0) target = $region33
    $region32: #{tpu_custom_call.1} parent=1 // pred_region
      _
    $region33: #{tpu_custom_call.1} parent=1 // pred_fallthru
      _
    // Predicated region
    $region34: #{tpu_custom_call.1} parent=1 // pred_check
      _
    $region35: #{tpu_custom_call.1} parent=1 // pred_check_branch
      %36 = sbr.rel (0) target = $region37
    $region36: #{tpu_custom_call.1} parent=1 // pred_region
      _
    $region37: #{tpu_custom_call.1} parent=1 // pred_fallthru
      _
    // Predicated region
    $region38: #{tpu_custom_call.1} parent=1 // pred_check
      _
    $region39: #{tpu_custom_call.1} parent=1 // pred_check_branch
      %38 = sbr.rel (0) target = $region41
    $region40: #{tpu_custom_call.1} parent=1 // pred_region
      _
    $region41: #{tpu_custom_call.1} parent=1 // pred_fallthru
      _
    // Predicated region
    $region42: #{tpu_custom_call.1} parent=1 // pred_check
      _
    $region43: #{tpu_custom_call.1} parent=1 // pred_check_branch
      %40 = sbr.rel (0) target = $region45
    $region44: #{tpu_custom_call.1} parent=1 // pred_region
      _
    $region45: #{tpu_custom_call.1} parent=1 // pred_fallthru
      _
    // Predicated region
    $region46: #{tpu_custom_call.1} parent=1 // pred_check
      _
    $region47: #{tpu_custom_call.1} parent=1 // pred_check_branch
      %42 = sbr.rel (0) target = $region49
    $region48: #{tpu_custom_call.1} parent=1 // pred_region
      _
    $region49: #{tpu_custom_call.1} parent=1 // pred_fallthru
      _
    // Predicated region
    $region50: #{tpu_custom_call.1} parent=1 // pred_check
      _
    $region51: #{tpu_custom_call.1} parent=1 // pred_check_branch
      %44 = sbr.rel (0) target = $region53
    $region52: #{tpu_custom_call.1} parent=1 // pred_region
      _
    $region53: #{tpu_custom_call.1} parent=1 // pred_fallthru
      _
    %v46 = vld [vmem:[%s0] sm:$0xff]
    %v47 = vld [vmem:[%s0 + $0x8] sm:$0xff]
    %v48 = vld [vmem:[%s5] sm:$0x1]
    %v49 = vld [vmem:[%s6] sm:$0x1]
    %vm50 = vcmask 261120
    %v51 = vsel %vm50, %v46, 0.0
    %52 = vadd.xlane.f32.xlu0 %v51
    %v53 = vpop.xlane.xlu0 %52
    %v54 = vsel %vm50, %v47, 0.0
    %55 = vadd.xlane.f32.xlu0 %v54
    %v56 = vpop.xlane.xlu0 %55
    %v57 = vrcp.pop 32.0
    %v58 = vmul.f32 %v53, %v57
    %v59 = vmul.f32 %v56, %v57
    %v60 = vsub.f32 %v46, %v58
    %v61 = vsub.f32 %v47, %v59
    %v62 = vmul.f32 %v60, %v60
    %v63 = vmul.f32 %v61, %v61
    %v64 = vsel %vm50, %v62, 0.0
    %65 = vadd.xlane.f32.xlu0 %v64
    %v66 = vpop.xlane.xlu0 %65
    %v67 = vsel %vm50, %v63, 0.0
    %68 = vadd.xlane.f32.xlu0 %v67
    %v69 = vpop.xlane.xlu0 %68
    %v70 = vmul.f32 %v66, %v57
    %v71 = vmul.f32 %v69, %v57
    %v72 = vadd.f32 %v70, 1e-05
    %v73 = vadd.f32 %v71, 1e-05
    %v74 = vrsqrt.pop %v72
    %v75 = vrsqrt.pop %v73
    %v76 = vmul.f32 %v60, %v74
    %v77 = vmul.f32 %v61, %v75
    %v79 = vlaneseq
    %v80 = vshrl.u32 %v79, 7
    %v81 = vsub.s32 0, %v80
    %v82 = vrot.slane %v48, %v81
    %v84 = vmul.f32 %v76, %v82
    %v85 = vmul.f32 %v77, %v82
    %v87 = vlaneseq
    %v88 = vshrl.u32 %v87, 7
    %v89 = vsub.s32 0, %v88
    %v90 = vrot.slane %v49, %v89
    %v92 = vadd.f32 %v84, %v90
    %v93 = vadd.f32 %v85, %v90
    %v94 = vpack.c.bf16 %v93, %v92
    %v95 = vld [vmem:[%s1] sm:$0xf]
    %v96 = vld [vmem:[%s1 + $0x4] sm:$0xf]
    %v97 = vld [vmem:[%s1 + $0x8] sm:$0xf]
    %v98 = vld [vmem:[%s1 + $0xc] sm:$0xf]
    %v99 = vld [vmem:[%s2] sm:$0x1]
    %v101 = vlaneseq
    %v102 = vshrl.u32 %v101, 7
    %v103 = vsub.s32 0, %v102
    %v104 = vrot.slane %v99, %v103
    %v110 = vunpack.c.l.b16 %v95
    %v111 = vunpack.c.l.b16 %v96
    %v112 = vunpack.c.l.b16 %v97
    %v113 = vunpack.c.l.b16 %v98
    %v114 = vpack.c.b16 %v111, %v110
    %v115 = vpack.c.b16 %v113, %v112
    %v119 = vsel %vm50, %v94, 0
    %121 = vmatprep.subr.bf16.mxu0 0
    %122 = vmatpush1.bf16.msra.mxu0 %v114
    %123 = vmatprep.subr.bf16.mxu0 0
    %124 = vmatpush1.bf16.msra.mxu0 %v115
    %125 = vmatprep.subr.bf16.mxu0 0
    %126 = vmatpush1.bf16.msra.mxu0 0
    %127 = vmatprep.subr.bf16.mxu0 0
    %128 = vmatpush1.bf16.msra.mxu0 0
    %129 = vmatprep.subr.bf16.mxu0 0
    %130 = vmatpush1.bf16.msra.mxu0 0
    %131 = vmatprep.subr.bf16.mxu0 0
    %132 = vmatpush1.bf16.msra.mxu0 0
    %133 = vmatprep.subr.bf16.mxu0 0
    %134 = vmatpush1.bf16.msra.mxu0 0
    %135 = vmatprep.subr.bf16.mxu0 0
    %136 = vmatpush1.bf16.msra.mxu0 0
    %137 = vmatprep.subr.bf16.mxu0 0
    %138 = vmatpush1.bf16.msra.mxu0 0
    %139 = vmatprep.subr.bf16.mxu0 0
    %140 = vmatpush1.bf16.msra.mxu0 0
    %141 = vmatprep.subr.bf16.mxu0 0
    %142 = vmatpush1.bf16.msra.mxu0 0
    %143 = vmatprep.subr.bf16.mxu0 0
    %144 = vmatpush1.bf16.msra.mxu0 0
    %145 = vmatprep.subr.bf16.mxu0 0
    %146 = vmatpush1.bf16.msra.mxu0 0
    %147 = vmatprep.subr.bf16.mxu0 0
    %148 = vmatpush1.bf16.msra.mxu0 0
    %149 = vmatprep.subr.bf16.mxu0 0
    %150 = vmatpush1.bf16.msra.mxu0 0
    %151 = vmatprep.subr.bf16.mxu0 0
    %152 = vmatpush1.bf16.msra.mxu0 0
    %153 = vmatprep.mubr.bf16.mxu0 0
    %154 = vmatmul.mubr.bf16.gmra.mrb[0].mxu0 %v119
    %v155 = vpop.f32.mrb[0].mxu0
    %v156 = vadd.f32 %v104, %v155
    %v157 = vpop.f32.mrb[0].mxu0
    %v158 = vpop.f32.mrb[0].mxu0
    %v159 = vadd.f32 %v104, %v158
    %v160 = vpop.f32.mrb[0].mxu0
    %161 = vdwg.mxu0
    %v162 = vpack.c.bf16 %v159, %v156
    %vm163 = vcmask 60416
    %164 = vst.msk [vmem:[#allocation2] sm:$0xf] %vm163, %v162
    %v166 = vunpack.c.l.b16 %v162
    %v167 = vpack.c.b16 %v166, %v166
    %168 = vrot.lane.b32.xlu0 %v167, 96
    %v169 = vpop.permute.xlu0 %168
    %171 = vst.msk [vmem:[#allocation3] sm:$0xf] %vm163, %v169
    %172 = vrot.lane.b32.xlu0 %v167, 64
    %v173 = vpop.permute.xlu0 %172
    %175 = vst.msk [vmem:[#allocation4] sm:$0xf] %vm163, %v173
    %v176 = vunpack.c.h.b16 %v162
    %v177 = vpack.c.b16 %v176, %v176
    %s179 = scalar_lea.vmem [#allocation2], 4
    %180 = vst.msk [vmem:[%s179] sm:$0xf] %vm163, %v177
    %181 = vrot.lane.b32.xlu0 %v177, 96
    %v182 = vpop.permute.xlu0 %181
    %s184 = scalar_lea.vmem [#allocation3], 4
    %185 = vst.msk [vmem:[%s184] sm:$0xf] %vm163, %v182
    %186 = vrot.lane.b32.xlu0 %v177, 64
    %v187 = vpop.permute.xlu0 %186
    %s189 = scalar_lea.vmem [#allocation4], 4
    %190 = vst.msk [vmem:[%s189] sm:$0xf] %vm163, %v187
    %191 = vrot.lane.b32.xlu0 %v167, 120
    %v192 = vpop.permute.xlu0 %191
    %s194 = scalar_lea.vmem [#allocation2], 8
    %195 = vst.msk [vmem:[%s194] sm:$0xf] %vm163, %v192
    %196 = vrot.lane.b32.xlu0 %v167, 88
    %v197 = vpop.permute.xlu0 %196
    %s199 = scalar_lea.vmem [#allocation3], 8
    %200 = vst.msk [vmem:[%s199] sm:$0xf] %vm163, %v197
    %201 = vrot.lane.b32.xlu0 %v167, 56
    %v202 = vpop.permute.xlu0 %201
    %s204 = scalar_lea.vmem [#allocation4], 8
    %205 = vst.msk [vmem:[%s204] sm:$0xf] %vm163, %v202
    %206 = vrot.lane.b32.xlu0 %v177, 120
    %v207 = vpop.permute.xlu0 %206
    %s209 = scalar_lea.vmem [#allocation2], 12
    %210 = vst.msk [vmem:[%s209] sm:$0xf] %vm163, %v207
    %211 = vrot.lane.b32.xlu0 %v177, 88
    %v212 = vpop.permute.xlu0 %211
    %s214 = scalar_lea.vmem [#allocation3], 12
    %215 = vst.msk [vmem:[%s214] sm:$0xf] %vm163, %v212
    %216 = vrot.lane.b32.xlu0 %v177, 56
    %v217 = vpop.permute.xlu0 %216
    %s219 = scalar_lea.vmem [#allocation4], 12
    %220 = vst.msk [vmem:[%s219] sm:$0xf] %vm163, %v217
    %221 = vrot.lane.b32.xlu0 %v167, 112
    %v222 = vpop.permute.xlu0 %221
    %s224 = scalar_lea.vmem [#allocation2], 16
    %225 = vst.msk [vmem:[%s224] sm:$0xf] %vm163, %v222
    %226 = vrot.lane.b32.xlu0 %v167, 80
    %v227 = vpop.permute.xlu0 %226
    %s229 = scalar_lea.vmem [#allocation3], 16
    %230 = vst.msk [vmem:[%s229] sm:$0xf] %vm163, %v227
    %231 = vrot.lane.b32.xlu0 %v167, 48
    %v232 = vpop.permute.xlu0 %231
    %s234 = scalar_lea.vmem [#allocation4], 16
    %235 = vst.msk [vmem:[%s234] sm:$0xf] %vm163, %v232
    %236 = vrot.lane.b32.xlu0 %v177, 112
    %v237 = vpop.permute.xlu0 %236
    %s239 = scalar_lea.vmem [#allocation2], 20
    %240 = vst.msk [vmem:[%s239] sm:$0xf] %vm163, %v237
    %241 = vrot.lane.b32.xlu0 %v177, 80
    %v242 = vpop.permute.xlu0 %241
    %s244 = scalar_lea.vmem [#allocation3], 20
    %245 = vst.msk [vmem:[%s244] sm:$0xf] %vm163, %v242
    %246 = vrot.lane.b32.xlu0 %v177, 48
    %v247 = vpop.permute.xlu0 %246
    %s249 = scalar_lea.vmem [#allocation4], 20
    %250 = vst.msk [vmem:[%s249] sm:$0xf] %vm163, %v247
    %251 = vrot.lane.b32.xlu0 %v167, 104
    %v252 = vpop.permute.xlu0 %251
    %s254 = scalar_lea.vmem [#allocation2], 24
    %255 = vst.msk [vmem:[%s254] sm:$0xf] %vm163, %v252
    %256 = vrot.lane.b32.xlu0 %v167, 72
    %v257 = vpop.permute.xlu0 %256
    %s259 = scalar_lea.vmem [#allocation3], 24
    %260 = vst.msk [vmem:[%s259] sm:$0xf] %vm163, %v257
    %261 = vrot.lane.b32.xlu0 %v167, 40
    %v262 = vpop.permute.xlu0 %261
    %s264 = scalar_lea.vmem [#allocation4], 24
    %265 = vst.msk [vmem:[%s264] sm:$0xf] %vm163, %v262
    %266 = vrot.lane.b32.xlu0 %v177, 104
    %v267 = vpop.permute.xlu0 %266
    %s269 = scalar_lea.vmem [#allocation2], 28
    %270 = vst.msk [vmem:[%s269] sm:$0xf] %vm163, %v267
    %271 = vrot.lane.b32.xlu0 %v177, 72
    %v272 = vpop.permute.xlu0 %271
    %s274 = scalar_lea.vmem [#allocation3], 28
    %275 = vst.msk [vmem:[%s274] sm:$0xf] %vm163, %v272
    %276 = vrot.lane.b32.xlu0 %v177, 40
    %v277 = vpop.permute.xlu0 %276
    %s279 = scalar_lea.vmem [#allocation4], 28
    %280 = vst.msk [vmem:[%s279] sm:$0xf] %vm163, %v277
    %v281 = vld [vmem:[#allocation2] sm:$0xf]
    %v282 = vld [vmem:[#allocation2 + $0x4] sm:$0xf]
    %v283 = vld [vmem:[#allocation2 + $0x8] sm:$0xf]
    %v284 = vld [vmem:[#allocation2 + $0xc] sm:$0xf]
    %v285 = vld [vmem:[#allocation2 + $0x10] sm:$0xf]
    %v286 = vld [vmem:[#allocation2 + $0x14] sm:$0xf]
    %v287 = vld [vmem:[#allocation2 + $0x18] sm:$0xf]
    %v288 = vld [vmem:[#allocation2 + $0x1c] sm:$0xf]
    %v289 = vld [vmem:[#allocation3] sm:$0xf]
    %v290 = vld [vmem:[#allocation3 + $0x4] sm:$0xf]
    %v291 = vld [vmem:[#allocation3 + $0x8] sm:$0xf]
    %v292 = vld [vmem:[#allocation3 + $0xc] sm:$0xf]
    %v293 = vld [vmem:[#allocation3 + $0x10] sm:$0xf]
    %v294 = vld [vmem:[#allocation3 + $0x14] sm:$0xf]
    %v295 = vld [vmem:[#allocation3 + $0x18] sm:$0xf]
    %v296 = vld [vmem:[#allocation3 + $0x1c] sm:$0xf]
    %vm297 = vcmask 64512
    %v299 = vsel %vm297, %v281, 0
    %v302 = vsel %vm297, %v289, 0
    %304 = vmatprep.subr.bf16.mxu0 0
    %305 = vmatpush1.bf16.xpose.msra.mxu0 %v302
    %306 = vmatprep.subr.bf16.mxu0 0
    %307 = vmatpush1.bf16.xpose.msra.mxu0 0
    %308 = vmatprep.subr.bf16.mxu0 0
    %309 = vmatpush1.bf16.xpose.msra.mxu0 0
    %310 = vmatprep.subr.bf16.mxu0 0
    %311 = vmatpush1.bf16.xpose.msra.mxu0 0
    %312 = vmatprep.subr.bf16.mxu0 0
    %313 = vmatpush1.bf16.xpose.msra.mxu0 0
    %314 = vmatprep.subr.bf16.mxu0 0
    %315 = vmatpush1.bf16.xpose.msra.mxu0 0
    %316 = vmatprep.subr.bf16.mxu0 0
    %317 = vmatpush1.bf16.xpose.msra.mxu0 0
    %318 = vmatprep.subr.bf16.mxu0 0
    %319 = vmatpush1.bf16.xpose.msra.mxu0 0
    %320 = vmatprep.subr.bf16.mxu0 0
    %321 = vmatpush1.bf16.xpose.msra.mxu0 0
    %322 = vmatprep.subr.bf16.mxu0 0
    %323 = vmatpush1.bf16.xpose.msra.mxu0 0
    %324 = vmatprep.subr.bf16.mxu0 0
    %325 = vmatpush1.bf16.xpose.msra.mxu0 0
    %326 = vmatprep.subr.bf16.mxu0 0
    %327 = vmatpush1.bf16.xpose.msra.mxu0 0
    %328 = vmatprep.subr.bf16.mxu0 0
    %329 = vmatpush1.bf16.xpose.msra.mxu0 0
    %330 = vmatprep.subr.bf16.mxu0 0
    %331 = vmatpush1.bf16.xpose.msra.mxu0 0
    %332 = vmatprep.subr.bf16.mxu0 0
    %333 = vmatpush1.bf16.xpose.msra.mxu0 0
    %334 = vmatprep.subr.bf16.mxu0 0
    %335 = vmatpush1.bf16.xpose.msra.mxu0 0
    %336 = vmatprep.mubr.bf16.mxu0 0
    %337 = vmatmul.mubr.bf16.gmra.mrb[0].mxu0 %v299
    %v338 = vpop.f32.mrb[0].mxu0
    %v339 = vadd.f32 0.0, %v338
    %v340 = vpop.f32.mrb[0].mxu0
    %v341 = vpop.f32.mrb[0].mxu0
    %v342 = vpop.f32.mrb[0].mxu0
    %343 = vdwg.mxu0
    %v345 = vsel %vm297, %v282, 0
    %v348 = vsel %vm297, %v290, 0
    %350 = vmatprep.subr.bf16.mxu0 0
    %351 = vmatpush1.bf16.xpose.msra.mxu0 %v348
    %352 = vmatprep.subr.bf16.mxu0 0
    %353 = vmatpush1.bf16.xpose.msra.mxu0 0
    %354 = vmatprep.subr.bf16.mxu0 0
    %355 = vmatpush1.bf16.xpose.msra.mxu0 0
    %356 = vmatprep.subr.bf16.mxu0 0
    %357 = vmatpush1.bf16.xpose.msra.mxu0 0
    %358 = vmatprep.subr.bf16.mxu0 0
    %359 = vmatpush1.bf16.xpose.msra.mxu0 0
    %360 = vmatprep.subr.bf16.mxu0 0
    %361 = vmatpush1.bf16.xpose.msra.mxu0 0
    %362 = vmatprep.subr.bf16.mxu0 0
    %363 = vmatpush1.bf16.xpose.msra.mxu0 0
    %364 = vmatprep.subr.bf16.mxu0 0
    %365 = vmatpush1.bf16.xpose.msra.mxu0 0
    %366 = vmatprep.subr.bf16.mxu0 0
    %367 = vmatpush1.bf16.xpose.msra.mxu0 0
    %368 = vmatprep.subr.bf16.mxu0 0
    %369 = vmatpush1.bf16.xpose.msra.mxu0 0
    %370 = vmatprep.subr.bf16.mxu0 0
    %371 = vmatpush1.bf16.xpose.msra.mxu0 0
    %372 = vmatprep.subr.bf16.mxu0 0
    %373 = vmatpush1.bf16.xpose.msra.mxu0 0
    %374 = vmatprep.subr.bf16.mxu0 0
    %375 = vmatpush1.bf16.xpose.msra.mxu0 0
    %376 = vmatprep.subr.bf16.mxu0 0
    %377 = vmatpush1.bf16.xpose.msra.mxu0 0
    %378 = vmatprep.subr.bf16.mxu0 0
    %379 = vmatpush1.bf16.xpose.msra.mxu0 0
    %380 = vmatprep.subr.bf16.mxu0 0
    %381 = vmatpush1.bf16.xpose.msra.mxu0 0
    %382 = vmatprep.mubr.bf16.mxu0 0
    %383 = vmatmul.mubr.bf16.gmra.mrb[0].mxu0 %v345
    %v384 = vpop.f32.mrb[0].mxu0
    %v385 = vadd.f32 0.0, %v384
    %v386 = vpop.f32.mrb[0].mxu0
    %v387 = vpop.f32.mrb[0].mxu0
    %v388 = vpop.f32.mrb[0].mxu0
    %389 = vdwg.mxu0
    %v391 = vsel %vm297, %v283, 0
    %v394 = vsel %vm297, %v291, 0
    %396 = vmatprep.subr.bf16.mxu0 0
    %397 = vmatpush1.bf16.xpose.msra.mxu0 %v394
    %398 = vmatprep.subr.bf16.mxu0 0
    %399 = vmatpush1.bf16.xpose.msra.mxu0 0
    %400 = vmatprep.subr.bf16.mxu0 0
    %401 = vmatpush1.bf16.xpose.msra.mxu0 0
    %402 = vmatprep.subr.bf16.mxu0 0
    %403 = vmatpush1.bf16.xpose.msra.mxu0 0
    %404 = vmatprep.subr.bf16.mxu0 0
    %405 = vmatpush1.bf16.xpose.msra.mxu0 0
    %406 = vmatprep.subr.bf16.mxu0 0
    %407 = vmatpush1.bf16.xpose.msra.mxu0 0
    %408 = vmatprep.subr.bf16.mxu0 0
    %409 = vmatpush1.bf16.xpose.msra.mxu0 0
    %410 = vmatprep.subr.bf16.mxu0 0
    %411 = vmatpush1.bf16.xpose.msra.mxu0 0
    %412 = vmatprep.subr.bf16.mxu0 0
    %413 = vmatpush1.bf16.xpose.msra.mxu0 0
    %414 = vmatprep.subr.bf16.mxu0 0
    %415 = vmatpush1.bf16.xpose.msra.mxu0 0
    %416 = vmatprep.subr.bf16.mxu0 0
    %417 = vmatpush1.bf16.xpose.msra.mxu0 0
    %418 = vmatprep.subr.bf16.mxu0 0
    %419 = vmatpush1.bf16.xpose.msra.mxu0 0
    %420 = vmatprep.subr.bf16.mxu0 0
    %421 = vmatpush1.bf16.xpose.msra.mxu0 0
    %422 = vmatprep.subr.bf16.mxu0 0
    %423 = vmatpush1.bf16.xpose.msra.mxu0 0
    %424 = vmatprep.subr.bf16.mxu0 0
    %425 = vmatpush1.bf16.xpose.msra.mxu0 0
    %426 = vmatprep.subr.bf16.mxu0 0
    %427 = vmatpush1.bf16.xpose.msra.mxu0 0
    %428 = vmatprep.mubr.bf16.mxu0 0
    %429 = vmatmul.mubr.bf16.gmra.mrb[0].mxu0 %v391
    %v430 = vpop.f32.mrb[0].mxu0
    %v431 = vadd.f32 0.0, %v430
    %v432 = vpop.f32.mrb[0].mxu0
    %v433 = vpop.f32.mrb[0].mxu0
    %v434 = vpop.f32.mrb[0].mxu0
    %435 = vdwg.mxu0
    %v437 = vsel %vm297, %v284, 0
    %v440 = vsel %vm297, %v292, 0
    %442 = vmatprep.subr.bf16.mxu0 0
    %443 = vmatpush1.bf16.xpose.msra.mxu0 %v440
    %444 = vmatprep.subr.bf16.mxu0 0
    %445 = vmatpush1.bf16.xpose.msra.mxu0 0
    %446 = vmatprep.subr.bf16.mxu0 0
    %447 = vmatpush1.bf16.xpose.msra.mxu0 0
    %448 = vmatprep.subr.bf16.mxu0 0
    %449 = vmatpush1.bf16.xpose.msra.mxu0 0
    %450 = vmatprep.subr.bf16.mxu0 0
    %451 = vmatpush1.bf16.xpose.msra.mxu0 0
    %452 = vmatprep.subr.bf16.mxu0 0
    %453 = vmatpush1.bf16.xpose.msra.mxu0 0
    %454 = vmatprep.subr.bf16.mxu0 0
    %455 = vmatpush1.bf16.xpose.msra.mxu0 0
    %456 = vmatprep.subr.bf16.mxu0 0
    %457 = vmatpush1.bf16.xpose.msra.mxu0 0
    %458 = vmatprep.subr.bf16.mxu0 0
    %459 = vmatpush1.bf16.xpose.msra.mxu0 0
    %460 = vmatprep.subr.bf16.mxu0 0
    %461 = vmatpush1.bf16.xpose.msra.mxu0 0
    %462 = vmatprep.subr.bf16.mxu0 0
    %463 = vmatpush1.bf16.xpose.msra.mxu0 0
    %464 = vmatprep.subr.bf16.mxu0 0
    %465 = vmatpush1.bf16.xpose.msra.mxu0 0
    %466 = vmatprep.subr.bf16.mxu0 0
    %467 = vmatpush1.bf16.xpose.msra.mxu0 0
    %468 = vmatprep.subr.bf16.mxu0 0
    %469 = vmatpush1.bf16.xpose.msra.mxu0 0
    %470 = vmatprep.subr.bf16.mxu0 0
    %471 = vmatpush1.bf16.xpose.msra.mxu0 0
    %472 = vmatprep.subr.bf16.mxu0 0
    %473 = vmatpush1.bf16.xpose.msra.mxu0 0
    %474 = vmatprep.mubr.bf16.mxu0 0
    %475 = vmatmul.mubr.bf16.gmra.mrb[0].mxu0 %v437
    %v476 = vpop.f32.mrb[0].mxu0
    %v477 = vadd.f32 0.0, %v476
    %v478 = vpop.f32.mrb[0].mxu0
    %v479 = vpop.f32.mrb[0].mxu0
    %v480 = vpop.f32.mrb[0].mxu0
    %481 = vdwg.mxu0
    %v483 = vsel %vm297, %v285, 0
    %v486 = vsel %vm297, %v293, 0
    %488 = vmatprep.subr.bf16.mxu0 0
    %489 = vmatpush1.bf16.xpose.msra.mxu0 %v486
    %490 = vmatprep.subr.bf16.mxu0 0
    %491 = vmatpush1.bf16.xpose.msra.mxu0 0
    %492 = vmatprep.subr.bf16.mxu0 0
    %493 = vmatpush1.bf16.xpose.msra.mxu0 0
    %494 = vmatprep.subr.bf16.mxu0 0
    %495 = vmatpush1.bf16.xpose.msra.mxu0 0
    %496 = vmatprep.subr.bf16.mxu0 0
    %497 = vmatpush1.bf16.xpose.msra.mxu0 0
    %498 = vmatprep.subr.bf16.mxu0 0
    %499 = vmatpush1.bf16.xpose.msra.mxu0 0
    %500 = vmatprep.subr.bf16.mxu0 0
    %501 = vmatpush1.bf16.xpose.msra.mxu0 0
    %502 = vmatprep.subr.bf16.mxu0 0
    %503 = vmatpush1.bf16.xpose.msra.mxu0 0
    %504 = vmatprep.subr.bf16.mxu0 0
    %505 = vmatpush1.bf16.xpose.msra.mxu0 0
    %506 = vmatprep.subr.bf16.mxu0 0
    %507 = vmatpush1.bf16.xpose.msra.mxu0 0
    %508 = vmatprep.subr.bf16.mxu0 0
    %509 = vmatpush1.bf16.xpose.msra.mxu0 0
    %510 = vmatprep.subr.bf16.mxu0 0
    %511 = vmatpush1.bf16.xpose.msra.mxu0 0
    %512 = vmatprep.subr.bf16.mxu0 0
    %513 = vmatpush1.bf16.xpose.msra.mxu0 0
    %514 = vmatprep.subr.bf16.mxu0 0
    %515 = vmatpush1.bf16.xpose.msra.mxu0 0
    %516 = vmatprep.subr.bf16.mxu0 0
    %517 = vmatpush1.bf16.xpose.msra.mxu0 0
    %518 = vmatprep.subr.bf16.mxu0 0
    %519 = vmatpush1.bf16.xpose.msra.mxu0 0
    %520 = vmatprep.mubr.bf16.mxu0 0
    %521 = vmatmul.mubr.bf16.gmra.mrb[0].mxu0 %v483
    %v522 = vpop.f32.mrb[0].mxu0
    %v523 = vadd.f32 0.0, %v522
    %v524 = vpop.f32.mrb[0].mxu0
    %v525 = vpop.f32.mrb[0].mxu0
    %v526 = vpop.f32.mrb[0].mxu0
    %527 = vdwg.mxu0
    %v529 = vsel %vm297, %v286, 0
    %v532 = vsel %vm297, %v294, 0
    %534 = vmatprep.subr.bf16.mxu0 0
    %535 = vmatpush1.bf16.xpose.msra.mxu0 %v532
    %536 = vmatprep.subr.bf16.mxu0 0
    %537 = vmatpush1.bf16.xpose.msra.mxu0 0
    %538 = vmatprep.subr.bf16.mxu0 0
    %539 = vmatpush1.bf16.xpose.msra.mxu0 0
    %540 = vmatprep.subr.bf16.mxu0 0
    %541 = vmatpush1.bf16.xpose.msra.mxu0 0
    %542 = vmatprep.subr.bf16.mxu0 0
    %543 = vmatpush1.bf16.xpose.msra.mxu0 0
    %544 = vmatprep.subr.bf16.mxu0 0
    %545 = vmatpush1.bf16.xpose.msra.mxu0 0
    %546 = vmatprep.subr.bf16.mxu0 0
    %547 = vmatpush1.bf16.xpose.msra.mxu0 0
    %548 = vmatprep.subr.bf16.mxu0 0
    %549 = vmatpush1.bf16.xpose.msra.mxu0 0
    %550 = vmatprep.subr.bf16.mxu0 0
    %551 = vmatpush1.bf16.xpose.msra.mxu0 0
    %552 = vmatprep.subr.bf16.mxu0 0
    %553 = vmatpush1.bf16.xpose.msra.mxu0 0
    %554 = vmatprep.subr.bf16.mxu0 0
    %555 = vmatpush1.bf16.xpose.msra.mxu0 0
    %556 = vmatprep.subr.bf16.mxu0 0
    %557 = vmatpush1.bf16.xpose.msra.mxu0 0
    %558 = vmatprep.subr.bf16.mxu0 0
    %559 = vmatpush1.bf16.xpose.msra.mxu0 0
    %560 = vmatprep.subr.bf16.mxu0 0
    %561 = vmatpush1.bf16.xpose.msra.mxu0 0
    %562 = vmatprep.subr.bf16.mxu0 0
    %563 = vmatpush1.bf16.xpose.msra.mxu0 0
    %564 = vmatprep.subr.bf16.mxu0 0
    %565 = vmatpush1.bf16.xpose.msra.mxu0 0
    %566 = vmatprep.mubr.bf16.mxu0 0
    %567 = vmatmul.mubr.bf16.gmra.mrb[0].mxu0 %v529
    %v568 = vpop.f32.mrb[0].mxu0
    %v569 = vadd.f32 0.0, %v568
    %v570 = vpop.f32.mrb[0].mxu0
    %v571 = vpop.f32.mrb[0].mxu0
    %v572 = vpop.f32.mrb[0].mxu0
    %573 = vdwg.mxu0
    %v575 = vsel %vm297, %v287, 0
    %v578 = vsel %vm297, %v295, 0
    %580 = vmatprep.subr.bf16.mxu0 0
    %581 = vmatpush1.bf16.xpose.msra.mxu0 %v578
    %582 = vmatprep.subr.bf16.mxu0 0
    %583 = vmatpush1.bf16.xpose.msra.mxu0 0
    %584 = vmatprep.subr.bf16.mxu0 0
    %585 = vmatpush1.bf16.xpose.msra.mxu0 0
    %586 = vmatprep.subr.bf16.mxu0 0
    %587 = vmatpush1.bf16.xpose.msra.mxu0 0
    %588 = vmatprep.subr.bf16.mxu0 0
    %589 = vmatpush1.bf16.xpose.msra.mxu0 0
    %590 = vmatprep.subr.bf16.mxu0 0
    %591 = vmatpush1.bf16.xpose.msra.mxu0 0
    %592 = vmatprep.subr.bf16.mxu0 0
    %593 = vmatpush1.bf16.xpose.msra.mxu0 0
    %594 = vmatprep.subr.bf16.mxu0 0
    %595 = vmatpush1.bf16.xpose.msra.mxu0 0
    %596 = vmatprep.subr.bf16.mxu0 0
    %597 = vmatpush1.bf16.xpose.msra.mxu0 0
    %598 = vmatprep.subr.bf16.mxu0 0
    %599 = vmatpush1.bf16.xpose.msra.mxu0 0
    %600 = vmatprep.subr.bf16.mxu0 0
    %601 = vmatpush1.bf16.xpose.msra.mxu0 0
    %602 = vmatprep.subr.bf16.mxu0 0
    %603 = vmatpush1.bf16.xpose.msra.mxu0 0
    %604 = vmatprep.subr.bf16.mxu0 0
    %605 = vmatpush1.bf16.xpose.msra.mxu0 0
    %606 = vmatprep.subr.bf16.mxu0 0
    %607 = vmatpush1.bf16.xpose.msra.mxu0 0
    %608 = vmatprep.subr.bf16.mxu0 0
    %609 = vmatpush1.bf16.xpose.msra.mxu0 0
    %610 = vmatprep.subr.bf16.mxu0 0
    %611 = vmatpush1.bf16.xpose.msra.mxu0 0
    %612 = vmatprep.mubr.bf16.mxu0 0
    %613 = vmatmul.mubr.bf16.gmra.mrb[0].mxu0 %v575
    %v614 = vpop.f32.mrb[0].mxu0
    %v615 = vadd.f32 0.0, %v614
    %v616 = vpop.f32.mrb[0].mxu0
    %v617 = vpop.f32.mrb[0].mxu0
    %v618 = vpop.f32.mrb[0].mxu0
    %619 = vdwg.mxu0
    %v621 = vsel %vm297, %v288, 0
    %v624 = vsel %vm297, %v296, 0
    %626 = vmatprep.subr.bf16.mxu0 0
    %627 = vmatpush1.bf16.xpose.msra.mxu0 %v624
    %628 = vmatprep.subr.bf16.mxu0 0
    %629 = vmatpush1.bf16.xpose.msra.mxu0 0
    %630 = vmatprep.subr.bf16.mxu0 0
    %631 = vmatpush1.bf16.xpose.msra.mxu0 0
    %632 = vmatprep.subr.bf16.mxu0 0
    %633 = vmatpush1.bf16.xpose.msra.mxu0 0
    %634 = vmatprep.subr.bf16.mxu0 0
    %635 = vmatpush1.bf16.xpose.msra.mxu0 0
    %636 = vmatprep.subr.bf16.mxu0 0
    %637 = vmatpush1.bf16.xpose.msra.mxu0 0
    %638 = vmatprep.subr.bf16.mxu0 0
    %639 = vmatpush1.bf16.xpose.msra.mxu0 0
    %640 = vmatprep.subr.bf16.mxu0 0
    %641 = vmatpush1.bf16.xpose.msra.mxu0 0
    %642 = vmatprep.subr.bf16.mxu0 0
    %643 = vmatpush1.bf16.xpose.msra.mxu0 0
    %644 = vmatprep.subr.bf16.mxu0 0
    %645 = vmatpush1.bf16.xpose.msra.mxu0 0
    %646 = vmatprep.subr.bf16.mxu0 0
    %647 = vmatpush1.bf16.xpose.msra.mxu0 0
    %648 = vmatprep.subr.bf16.mxu0 0
    %649 = vmatpush1.bf16.xpose.msra.mxu0 0
    %650 = vmatprep.subr.bf16.mxu0 0
    %651 = vmatpush1.bf16.xpose.msra.mxu0 0
    %652 = vmatprep.subr.bf16.mxu0 0
    %653 = vmatpush1.bf16.xpose.msra.mxu0 0
    %654 = vmatprep.subr.bf16.mxu0 0
    %655 = vmatpush1.bf16.xpose.msra.mxu0 0
    %656 = vmatprep.subr.bf16.mxu0 0
    %657 = vmatpush1.bf16.xpose.msra.mxu0 0
    %658 = vmatprep.mubr.bf16.mxu0 0
    %659 = vmatmul.mubr.bf16.gmra.mrb[0].mxu0 %v621
    %v660 = vpop.f32.mrb[0].mxu0
    %v661 = vadd.f32 0.0, %v660
    %v662 = vpop.f32.mrb[0].mxu0
    %v663 = vpop.f32.mrb[0].mxu0
    %v664 = vpop.f32.mrb[0].mxu0
    %665 = vdwg.mxu0
    %v666 = vsel %vm297, %v339, -inf
    %667 = vmax.xlane.f32.xlu0 %v666
    %v668 = vpop.xlane.xlu0 %667
    %v669 = vsel %vm297, %v385, -inf
    %670 = vmax.xlane.f32.xlu0 %v669
    %v671 = vpop.xlane.xlu0 %670
    %v672 = vsel %vm297, %v431, -inf
    %673 = vmax.xlane.f32.xlu0 %v672
    %v674 = vpop.xlane.xlu0 %673
    %v675 = vsel %vm297, %v477, -inf
    %676 = vmax.xlane.f32.xlu0 %v675
    %v677 = vpop.xlane.xlu0 %676
    %v678 = vsel %vm297, %v523, -inf
    %679 = vmax.xlane.f32.xlu0 %v678
    %v680 = vpop.xlane.xlu0 %679
    %v681 = vsel %vm297, %v569, -inf
    %682 = vmax.xlane.f32.xlu0 %v681
    %v683 = vpop.xlane.xlu0 %682
    %v684 = vsel %vm297, %v615, -inf
    %685 = vmax.xlane.f32.xlu0 %v684
    %v686 = vpop.xlane.xlu0 %685
    %v687 = vsel %vm297, %v661, -inf
    %688 = vmax.xlane.f32.xlu0 %v687
    %v689 = vpop.xlane.xlu0 %688
    %v690 = vsub.f32 %v339, %v668
    %v691 = vsub.f32 %v385, %v671
    %v692 = vsub.f32 %v431, %v674
    %v693 = vsub.f32 %v477, %v677
    %v694 = vsub.f32 %v523, %v680
    %v695 = vsub.f32 %v569, %v683
    %v696 = vsub.f32 %v615, %v686
    %v697 = vsub.f32 %v661, %v689
    %v698 = vmul.f32 %v690, 1.442695
    %v699 = vpow.pop %v698
    %v700 = vmul.f32 %v691, 1.442695
    %v701 = vpow.pop %v700
    %v702 = vmul.f32 %v692, 1.442695
    %v703 = vpow.pop %v702
    %v704 = vmul.f32 %v693, 1.442695
    %v705 = vpow.pop %v704
    %v706 = vmul.f32 %v694, 1.442695
    %v707 = vpow.pop %v706
    %v708 = vmul.f32 %v695, 1.442695
    %v709 = vpow.pop %v708
    %v710 = vmul.f32 %v696, 1.442695
    %v711 = vpow.pop %v710
    %v712 = vmul.f32 %v697, 1.442695
    %v713 = vpow.pop %v712
    %v714 = vsel %vm297, %v699, 0.0
    %715 = vadd.xlane.f32.xlu0 %v714
    %v716 = vpop.xlane.xlu0 %715
    %v717 = vsel %vm297, %v701, 0.0
    %718 = vadd.xlane.f32.xlu0 %v717
    %v719 = vpop.xlane.xlu0 %718
    %v720 = vsel %vm297, %v703, 0.0
    %721 = vadd.xlane.f32.xlu0 %v720
    %v722 = vpop.xlane.xlu0 %721
    %v723 = vsel %vm297, %v705, 0.0
    %724 = vadd.xlane.f32.xlu0 %v723
    %v725 = vpop.xlane.xlu0 %724
    %v726 = vsel %vm297, %v707, 0.0
    %727 = vadd.xlane.f32.xlu0 %v726
    %v728 = vpop.xlane.xlu0 %727
    %v729 = vsel %vm297, %v709, 0.0
    %730 = vadd.xlane.f32.xlu0 %v729
    %v731 = vpop.xlane.xlu0 %730
    %v732 = vsel %vm297, %v711, 0.0
    %733 = vadd.xlane.f32.xlu0 %v732
    %v734 = vpop.xlane.xlu0 %733
    %v735 = vsel %vm297, %v713, 0.0
    %736 = vadd.xlane.f32.xlu0 %v735
    %v737 = vpop.xlane.xlu0 %736
    %v738 = vpack.c.bf16 %v699, %v699
    %v739 = vpack.c.bf16 %v701, %v701
    %v740 = vpack.c.bf16 %v703, %v703
    %v741 = vpack.c.bf16 %v705, %v705
    %v742 = vpack.c.bf16 %v707, %v707
    %v743 = vpack.c.bf16 %v709, %v709
    %v744 = vpack.c.bf16 %v711, %v711
    %v745 = vpack.c.bf16 %v713, %v713
    %v746 = vld [vmem:[#allocation4] sm:$0xf]
    %v747 = vld [vmem:[#allocation4 + $0x4] sm:$0xf]
    %v748 = vld [vmem:[#allocation4 + $0x8] sm:$0xf]
    %v749 = vld [vmem:[#allocation4 + $0xc] sm:$0xf]
    %v750 = vld [vmem:[#allocation4 + $0x10] sm:$0xf]
    %v751 = vld [vmem:[#allocation4 + $0x14] sm:$0xf]
    %v752 = vld [vmem:[#allocation4 + $0x18] sm:$0xf]
    %v753 = vld [vmem:[#allocation4 + $0x1c] sm:$0xf]
    %v755 = vsel %vm297, %v738, 0
    %vm757 = vcmask 1043456
    %v759 = vsel %vm757, %v746, 0
    %761 = vmatprep.subr.bf16.mxu0 0
    %762 = vmatpush1.bf16.msra.mxu0 %v759
    %763 = vmatprep.subr.bf16.mxu0 0
    %764 = vmatpush1.bf16.msra.mxu0 0
    %765 = vmatprep.subr.bf16.mxu0 0
    %766 = vmatpush1.bf16.msra.mxu0 0
    %767 = vmatprep.subr.bf16.mxu0 0
    %768 = vmatpush1.bf16.msra.mxu0 0
    %769 = vmatprep.subr.bf16.mxu0 0
    %770 = vmatpush1.bf16.msra.mxu0 0
    %771 = vmatprep.subr.bf16.mxu0 0
    %772 = vmatpush1.bf16.msra.mxu0 0
    %773 = vmatprep.subr.bf16.mxu0 0
    %774 = vmatpush1.bf16.msra.mxu0 0
    %775 = vmatprep.subr.bf16.mxu0 0
    %776 = vmatpush1.bf16.msra.mxu0 0
    %777 = vmatprep.subr.bf16.mxu0 0
    %778 = vmatpush1.bf16.msra.mxu0 0
    %779 = vmatprep.subr.bf16.mxu0 0
    %780 = vmatpush1.bf16.msra.mxu0 0
    %781 = vmatprep.subr.bf16.mxu0 0
    %782 = vmatpush1.bf16.msra.mxu0 0
    %783 = vmatprep.subr.bf16.mxu0 0
    %784 = vmatpush1.bf16.msra.mxu0 0
    %785 = vmatprep.subr.bf16.mxu0 0
    %786 = vmatpush1.bf16.msra.mxu0 0
    %787 = vmatprep.subr.bf16.mxu0 0
    %788 = vmatpush1.bf16.msra.mxu0 0
    %789 = vmatprep.subr.bf16.mxu0 0
    %790 = vmatpush1.bf16.msra.mxu0 0
    %791 = vmatprep.subr.bf16.mxu0 0
    %792 = vmatpush1.bf16.msra.mxu0 0
    %793 = vmatprep.mubr.bf16.mxu0 0
    %794 = vmatmul.mubr.bf16.gmra.mrb[0].mxu0 %v755
    %v795 = vpop.f32.mrb[0].mxu0
    %v796 = vadd.f32 0.0, %v795
    %v797 = vpop.f32.mrb[0].mxu0
    %v798 = vpop.f32.mrb[0].mxu0
    %v799 = vpop.f32.mrb[0].mxu0
    %800 = vdwg.mxu0
    %v802 = vsel %vm297, %v739, 0
    %v805 = vsel %vm757, %v747, 0
    %807 = vmatprep.subr.bf16.mxu0 0
    %808 = vmatpush1.bf16.msra.mxu0 %v805
    %809 = vmatprep.subr.bf16.mxu0 0
    %810 = vmatpush1.bf16.msra.mxu0 0
    %811 = vmatprep.subr.bf16.mxu0 0
    %812 = vmatpush1.bf16.msra.mxu0 0
    %813 = vmatprep.subr.bf16.mxu0 0
    %814 = vmatpush1.bf16.msra.mxu0 0
    %815 = vmatprep.subr.bf16.mxu0 0
    %816 = vmatpush1.bf16.msra.mxu0 0
    %817 = vmatprep.subr.bf16.mxu0 0
    %818 = vmatpush1.bf16.msra.mxu0 0
    %819 = vmatprep.subr.bf16.mxu0 0
    %820 = vmatpush1.bf16.msra.mxu0 0
    %821 = vmatprep.subr.bf16.mxu0 0
    %822 = vmatpush1.bf16.msra.mxu0 0
    %823 = vmatprep.subr.bf16.mxu0 0
    %824 = vmatpush1.bf16.msra.mxu0 0
    %825 = vmatprep.subr.bf16.mxu0 0
    %826 = vmatpush1.bf16.msra.mxu0 0
    %827 = vmatprep.subr.bf16.mxu0 0
    %828 = vmatpush1.bf16.msra.mxu0 0
    %829 = vmatprep.subr.bf16.mxu0 0
    %830 = vmatpush1.bf16.msra.mxu0 0
    %831 = vmatprep.subr.bf16.mxu0 0
    %832 = vmatpush1.bf16.msra.mxu0 0
    %833 = vmatprep.subr.bf16.mxu0 0
    %834 = vmatpush1.bf16.msra.mxu0 0
    %835 = vmatprep.subr.bf16.mxu0 0
    %836 = vmatpush1.bf16.msra.mxu0 0
    %837 = vmatprep.subr.bf16.mxu0 0
    %838 = vmatpush1.bf16.msra.mxu0 0
    %839 = vmatprep.mubr.bf16.mxu0 0
    %840 = vmatmul.mubr.bf16.gmra.mrb[0].mxu0 %v802
    %v841 = vpop.f32.mrb[0].mxu0
    %v842 = vadd.f32 0.0, %v841
    %v843 = vpop.f32.mrb[0].mxu0
    %v844 = vpop.f32.mrb[0].mxu0
    %v845 = vpop.f32.mrb[0].mxu0
    %846 = vdwg.mxu0
    %v848 = vsel %vm297, %v740, 0
    %v851 = vsel %vm757, %v748, 0
    %853 = vmatprep.subr.bf16.mxu0 0
    %854 = vmatpush1.bf16.msra.mxu0 %v851
    %855 = vmatprep.subr.bf16.mxu0 0
    %856 = vmatpush1.bf16.msra.mxu0 0
    %857 = vmatprep.subr.bf16.mxu0 0
    %858 = vmatpush1.bf16.msra.mxu0 0
    %859 = vmatprep.subr.bf16.mxu0 0
    %860 = vmatpush1.bf16.msra.mxu0 0
    %861 = vmatprep.subr.bf16.mxu0 0
    %862 = vmatpush1.bf16.msra.mxu0 0
    %863 = vmatprep.subr.bf16.mxu0 0
    %864 = vmatpush1.bf16.msra.mxu0 0
    %865 = vmatprep.subr.bf16.mxu0 0
    %866 = vmatpush1.bf16.msra.mxu0 0
    %867 = vmatprep.subr.bf16.mxu0 0
    %868 = vmatpush1.bf16.msra.mxu0 0
    %869 = vmatprep.subr.bf16.mxu0 0
    %870 = vmatpush1.bf16.msra.mxu0 0
    %871 = vmatprep.subr.bf16.mxu0 0
    %872 = vmatpush1.bf16.msra.mxu0 0
    %873 = vmatprep.subr.bf16.mxu0 0
    %874 = vmatpush1.bf16.msra.mxu0 0
    %875 = vmatprep.subr.bf16.mxu0 0
    %876 = vmatpush1.bf16.msra.mxu0 0
    %877 = vmatprep.subr.bf16.mxu0 0
    %878 = vmatpush1.bf16.msra.mxu0 0
    %879 = vmatprep.subr.bf16.mxu0 0
    %880 = vmatpush1.bf16.msra.mxu0 0
    %881 = vmatprep.subr.bf16.mxu0 0
    %882 = vmatpush1.bf16.msra.mxu0 0
    %883 = vmatprep.subr.bf16.mxu0 0
    %884 = vmatpush1.bf16.msra.mxu0 0
    %885 = vmatprep.mubr.bf16.mxu0 0
    %886 = vmatmul.mubr.bf16.gmra.mrb[0].mxu0 %v848
    %v887 = vpop.f32.mrb[0].mxu0
    %v888 = vadd.f32 0.0, %v887
    %v889 = vpop.f32.mrb[0].mxu0
    %v890 = vpop.f32.mrb[0].mxu0
    %v891 = vpop.f32.mrb[0].mxu0
    %892 = vdwg.mxu0
    %v894 = vsel %vm297, %v741, 0
    %v897 = vsel %vm757, %v749, 0
    %899 = vmatprep.subr.bf16.mxu0 0
    %900 = vmatpush1.bf16.msra.mxu0 %v897
    %901 = vmatprep.subr.bf16.mxu0 0
    %902 = vmatpush1.bf16.msra.mxu0 0
    %903 = vmatprep.subr.bf16.mxu0 0
    %904 = vmatpush1.bf16.msra.mxu0 0
    %905 = vmatprep.subr.bf16.mxu0 0
    %906 = vmatpush1.bf16.msra.mxu0 0
    %907 = vmatprep.subr.bf16.mxu0 0
    %908 = vmatpush1.bf16.msra.mxu0 0
    %909 = vmatprep.subr.bf16.mxu0 0
    %910 = vmatpush1.bf16.msra.mxu0 0
    %911 = vmatprep.subr.bf16.mxu0 0
    %912 = vmatpush1.bf16.msra.mxu0 0
    %913 = vmatprep.subr.bf16.mxu0 0
    %914 = vmatpush1.bf16.msra.mxu0 0
    %915 = vmatprep.subr.bf16.mxu0 0
    %916 = vmatpush1.bf16.msra.mxu0 0
    %917 = vmatprep.subr.bf16.mxu0 0
    %918 = vmatpush1.bf16.msra.mxu0 0
    %919 = vmatprep.subr.bf16.mxu0 0
    %920 = vmatpush1.bf16.msra.mxu0 0
    %921 = vmatprep.subr.bf16.mxu0 0
    %922 = vmatpush1.bf16.msra.mxu0 0
    %923 = vmatprep.subr.bf16.mxu0 0
    %924 = vmatpush1.bf16.msra.mxu0 0
    %925 = vmatprep.subr.bf16.mxu0 0
    %926 = vmatpush1.bf16.msra.mxu0 0
    %927 = vmatprep.subr.bf16.mxu0 0
    %928 = vmatpush1.bf16.msra.mxu0 0
    %929 = vmatprep.subr.bf16.mxu0 0
    %930 = vmatpush1.bf16.msra.mxu0 0
    %931 = vmatprep.mubr.bf16.mxu0 0
    %932 = vmatmul.mubr.bf16.gmra.mrb[0].mxu0 %v894
    %v933 = vpop.f32.mrb[0].mxu0
    %v934 = vadd.f32 0.0, %v933
    %v935 = vpop.f32.mrb[0].mxu0
    %v936 = vpop.f32.mrb[0].mxu0
    %v937 = vpop.f32.mrb[0].mxu0
    %938 = vdwg.mxu0
    %v940 = vsel %vm297, %v742, 0
    %v943 = vsel %vm757, %v750, 0
    %945 = vmatprep.subr.bf16.mxu0 0
    %946 = vmatpush1.bf16.msra.mxu0 %v943
    %947 = vmatprep.subr.bf16.mxu0 0
    %948 = vmatpush1.bf16.msra.mxu0 0
    %949 = vmatprep.subr.bf16.mxu0 0
    %950 = vmatpush1.bf16.msra.mxu0 0
    %951 = vmatprep.subr.bf16.mxu0 0
    %952 = vmatpush1.bf16.msra.mxu0 0
    %953 = vmatprep.subr.bf16.mxu0 0
    %954 = vmatpush1.bf16.msra.mxu0 0
    %955 = vmatprep.subr.bf16.mxu0 0
    %956 = vmatpush1.bf16.msra.mxu0 0
    %957 = vmatprep.subr.bf16.mxu0 0
    %958 = vmatpush1.bf16.msra.mxu0 0
    %959 = vmatprep.subr.bf16.mxu0 0
    %960 = vmatpush1.bf16.msra.mxu0 0
    %961 = vmatprep.subr.bf16.mxu0 0
    %962 = vmatpush1.bf16.msra.mxu0 0
    %963 = vmatprep.subr.bf16.mxu0 0
    %964 = vmatpush1.bf16.msra.mxu0 0
    %965 = vmatprep.subr.bf16.mxu0 0
    %966 = vmatpush1.bf16.msra.mxu0 0
    %967 = vmatprep.subr.bf16.mxu0 0
    %968 = vmatpush1.bf16.msra.mxu0 0
    %969 = vmatprep.subr.bf16.mxu0 0
    %970 = vmatpush1.bf16.msra.mxu0 0
    %971 = vmatprep.subr.bf16.mxu0 0
    %972 = vmatpush1.bf16.msra.mxu0 0
    %973 = vmatprep.subr.bf16.mxu0 0
    %974 = vmatpush1.bf16.msra.mxu0 0
    %975 = vmatprep.subr.bf16.mxu0 0
    %976 = vmatpush1.bf16.msra.mxu0 0
    %977 = vmatprep.mubr.bf16.mxu0 0
    %978 = vmatmul.mubr.bf16.gmra.mrb[0].mxu0 %v940
    %v979 = vpop.f32.mrb[0].mxu0
    %v980 = vadd.f32 0.0, %v979
    %v981 = vpop.f32.mrb[0].mxu0
    %v982 = vpop.f32.mrb[0].mxu0
    %v983 = vpop.f32.mrb[0].mxu0
    %984 = vdwg.mxu0
    %v986 = vsel %vm297, %v743, 0
    %v989 = vsel %vm757, %v751, 0
    %991 = vmatprep.subr.bf16.mxu0 0
    %992 = vmatpush1.bf16.msra.mxu0 %v989
    %993 = vmatprep.subr.bf16.mxu0 0
    %994 = vmatpush1.bf16.msra.mxu0 0
    %995 = vmatprep.subr.bf16.mxu0 0
    %996 = vmatpush1.bf16.msra.mxu0 0
    %997 = vmatprep.subr.bf16.mxu0 0
    %998 = vmatpush1.bf16.msra.mxu0 0
    %999 = vmatprep.subr.bf16.mxu0 0
    %1000 = vmatpush1.bf16.msra.mxu0 0
    %1001 = vmatprep.subr.bf16.mxu0 0
    %1002 = vmatpush1.bf16.msra.mxu0 0
    %1003 = vmatprep.subr.bf16.mxu0 0
    %1004 = vmatpush1.bf16.msra.mxu0 0
    %1005 = vmatprep.subr.bf16.mxu0 0
    %1006 = vmatpush1.bf16.msra.mxu0 0
    %1007 = vmatprep.subr.bf16.mxu0 0
    %1008 = vmatpush1.bf16.msra.mxu0 0
    %1009 = vmatprep.subr.bf16.mxu0 0
    %1010 = vmatpush1.bf16.msra.mxu0 0
    %1011 = vmatprep.subr.bf16.mxu0 0
    %1012 = vmatpush1.bf16.msra.mxu0 0
    %1013 = vmatprep.subr.bf16.mxu0 0
    %1014 = vmatpush1.bf16.msra.mxu0 0
    %1015 = vmatprep.subr.bf16.mxu0 0
    %1016 = vmatpush1.bf16.msra.mxu0 0
    %1017 = vmatprep.subr.bf16.mxu0 0
    %1018 = vmatpush1.bf16.msra.mxu0 0
    %1019 = vmatprep.subr.bf16.mxu0 0
    %1020 = vmatpush1.bf16.msra.mxu0 0
    %1021 = vmatprep.subr.bf16.mxu0 0
    %1022 = vmatpush1.bf16.msra.mxu0 0
    %1023 = vmatprep.mubr.bf16.mxu0 0
    %1024 = vmatmul.mubr.bf16.gmra.mrb[0].mxu0 %v986
    %v1025 = vpop.f32.mrb[0].mxu0
    %v1026 = vadd.f32 0.0, %v1025
    %v1027 = vpop.f32.mrb[0].mxu0
    %v1028 = vpop.f32.mrb[0].mxu0
    %v1029 = vpop.f32.mrb[0].mxu0
    %1030 = vdwg.mxu0
    %v1032 = vsel %vm297, %v744, 0
    %v1035 = vsel %vm757, %v752, 0
    %1037 = vmatprep.subr.bf16.mxu0 0
    %1038 = vmatpush1.bf16.msra.mxu0 %v1035
    %1039 = vmatprep.subr.bf16.mxu0 0
    %1040 = vmatpush1.bf16.msra.mxu0 0
    %1041 = vmatprep.subr.bf16.mxu0 0
    %1042 = vmatpush1.bf16.msra.mxu0 0
    %1043 = vmatprep.subr.bf16.mxu0 0
    %1044 = vmatpush1.bf16.msra.mxu0 0
    %1045 = vmatprep.subr.bf16.mxu0 0
    %1046 = vmatpush1.bf16.msra.mxu0 0
    %1047 = vmatprep.subr.bf16.mxu0 0
    %1048 = vmatpush1.bf16.msra.mxu0 0
    %1049 = vmatprep.subr.bf16.mxu0 0
    %1050 = vmatpush1.bf16.msra.mxu0 0
    %1051 = vmatprep.subr.bf16.mxu0 0
    %1052 = vmatpush1.bf16.msra.mxu0 0
    %1053 = vmatprep.subr.bf16.mxu0 0
    %1054 = vmatpush1.bf16.msra.mxu0 0
    %1055 = vmatprep.subr.bf16.mxu0 0
    %1056 = vmatpush1.bf16.msra.mxu0 0
    %1057 = vmatprep.subr.bf16.mxu0 0
    %1058 = vmatpush1.bf16.msra.mxu0 0
    %1059 = vmatprep.subr.bf16.mxu0 0
    %1060 = vmatpush1.bf16.msra.mxu0 0
    %1061 = vmatprep.subr.bf16.mxu0 0
    %1062 = vmatpush1.bf16.msra.mxu0 0
    %1063 = vmatprep.subr.bf16.mxu0 0
    %1064 = vmatpush1.bf16.msra.mxu0 0
    %1065 = vmatprep.subr.bf16.mxu0 0
    %1066 = vmatpush1.bf16.msra.mxu0 0
    %1067 = vmatprep.subr.bf16.mxu0 0
    %1068 = vmatpush1.bf16.msra.mxu0 0
    %1069 = vmatprep.mubr.bf16.mxu0 0
    %1070 = vmatmul.mubr.bf16.gmra.mrb[0].mxu0 %v1032
    %v1071 = vpop.f32.mrb[0].mxu0
    %v1072 = vadd.f32 0.0, %v1071
    %v1073 = vpop.f32.mrb[0].mxu0
    %v1074 = vpop.f32.mrb[0].mxu0
    %v1075 = vpop.f32.mrb[0].mxu0
    %1076 = vdwg.mxu0
    %v1078 = vsel %vm297, %v745, 0
    %v1081 = vsel %vm757, %v753, 0
    %1083 = vmatprep.subr.bf16.mxu0 0
    %1084 = vmatpush1.bf16.msra.mxu0 %v1081
    %1085 = vmatprep.subr.bf16.mxu0 0
    %1086 = vmatpush1.bf16.msra.mxu0 0
    %1087 = vmatprep.subr.bf16.mxu0 0
    %1088 = vmatpush1.bf16.msra.mxu0 0
    %1089 = vmatprep.subr.bf16.mxu0 0
    %1090 = vmatpush1.bf16.msra.mxu0 0
    %1091 = vmatprep.subr.bf16.mxu0 0
    %1092 = vmatpush1.bf16.msra.mxu0 0
    %1093 = vmatprep.subr.bf16.mxu0 0
    %1094 = vmatpush1.bf16.msra.mxu0 0
    %1095 = vmatprep.subr.bf16.mxu0 0
    %1096 = vmatpush1.bf16.msra.mxu0 0
    %1097 = vmatprep.subr.bf16.mxu0 0
    %1098 = vmatpush1.bf16.msra.mxu0 0
    %1099 = vmatprep.subr.bf16.mxu0 0
    %1100 = vmatpush1.bf16.msra.mxu0 0
    %1101 = vmatprep.subr.bf16.mxu0 0
    %1102 = vmatpush1.bf16.msra.mxu0 0
    %1103 = vmatprep.subr.bf16.mxu0 0
    %1104 = vmatpush1.bf16.msra.mxu0 0
    %1105 = vmatprep.subr.bf16.mxu0 0
    %1106 = vmatpush1.bf16.msra.mxu0 0
    %1107 = vmatprep.subr.bf16.mxu0 0
    %1108 = vmatpush1.bf16.msra.mxu0 0
    %1109 = vmatprep.subr.bf16.mxu0 0
    %1110 = vmatpush1.bf16.msra.mxu0 0
    %1111 = vmatprep.subr.bf16.mxu0 0
    %1112 = vmatpush1.bf16.msra.mxu0 0
    %1113 = vmatprep.subr.bf16.mxu0 0
    %1114 = vmatpush1.bf16.msra.mxu0 0
    %1115 = vmatprep.mubr.bf16.mxu0 0
    %1116 = vmatmul.mubr.bf16.gmra.mrb[0].mxu0 %v1078
    %v1117 = vpop.f32.mrb[0].mxu0
    %v1118 = vadd.f32 0.0, %v1117
    %v1119 = vpop.f32.mrb[0].mxu0
    %v1120 = vpop.f32.mrb[0].mxu0
    %v1121 = vpop.f32.mrb[0].mxu0
    %1122 = vdwg.mxu0
    %v1123 = vrcp.pop %v716
    %v1124 = vrcp.pop %v719
    %v1125 = vrcp.pop %v722
    %v1126 = vrcp.pop %v725
    %v1127 = vrcp.pop %v728
    %v1128 = vrcp.pop %v731
    %v1129 = vrcp.pop %v734
    %v1130 = vrcp.pop %v737
    %v1131 = vmul.f32 %v796, %v1123
    %v1132 = vmul.f32 %v842, %v1124
    %v1133 = vmul.f32 %v888, %v1125
    %v1134 = vmul.f32 %v934, %v1126
    %v1135 = vmul.f32 %v980, %v1127
    %v1136 = vmul.f32 %v1026, %v1128
    %v1137 = vmul.f32 %v1072, %v1129
    %v1138 = vmul.f32 %v1118, %v1130
    %v1139 = vpack.c.bf16 %v1131, %v1131
    %v1140 = vpack.c.bf16 %v1132, %v1132
    %v1141 = vpack.c.bf16 %v1133, %v1133
    %v1142 = vpack.c.bf16 %v1134, %v1134
    %v1143 = vpack.c.bf16 %v1135, %v1135
    %v1144 = vpack.c.bf16 %v1136, %v1136
    %v1145 = vpack.c.bf16 %v1137, %v1137
    %v1146 = vpack.c.bf16 %v1138, %v1138
    %1147 = vst.msk [vmem:[#allocation5] sm:$0xf] %vm163, %v1139
    %v1149 = vrot.slane %v1140, 4
    %vm1151 = vcmask 64516
    %1152 = vst.msk [vmem:[#allocation5] sm:$0xf0] %vm1151, %v1149
    %1154 = vrot.lane.b32.xlu0 %v1141, 8
    %v1155 = vpop.permute.xlu0 %1154
    %vm1157 = vcmask 126016
    %1158 = vst.msk [vmem:[#allocation5] sm:$0xf] %vm1157, %v1155
    %v1160 = vrot.slane %v1142, 4
    %1161 = vrot.lane.b32.xlu0 %v1160, 8
    %v1162 = vpop.permute.xlu0 %1161
    %vm1164 = vcmask 130116
    %1165 = vst.msk [vmem:[#allocation5] sm:$0xf0] %vm1164, %v1162
    %1167 = vrot.lane.b32.xlu0 %v1143, 16
    %v1168 = vpop.permute.xlu0 %1167
    %vm1170 = vcmask 191616
    %1171 = vst.msk [vmem:[#allocation5] sm:$0xf] %vm1170, %v1168
    %v1173 = vrot.slane %v1144, 4
    %1174 = vrot.lane.b32.xlu0 %v1173, 16
    %v1175 = vpop.permute.xlu0 %1174
    %vm1177 = vcmask 195716
    %1178 = vst.msk [vmem:[#allocation5] sm:$0xf0] %vm1177, %v1175
    %1180 = vrot.lane.b32.xlu0 %v1145, 24
    %v1181 = vpop.permute.xlu0 %1180
    %vm1183 = vcmask 257216
    %1184 = vst.msk [vmem:[#allocation5] sm:$0xf] %vm1183, %v1181
    %v1186 = vrot.slane %v1146, 4
    %1187 = vrot.lane.b32.xlu0 %v1186, 24
    %v1188 = vpop.permute.xlu0 %1187
    %vm1190 = vcmask 261316
    %1191 = vst.msk [vmem:[#allocation5] sm:$0xf0] %vm1190, %v1188
    %v1192 = vld [vmem:[#allocation5] sm:$0xff]
    %v1193 = vld [vmem:[%s3] sm:$0xf]
    %v1194 = vld [vmem:[%s3 + $0x4] sm:$0xf]
    %v1195 = vld [vmem:[%s3 + $0x8] sm:$0xf]
    %v1196 = vld [vmem:[%s3 + $0xc] sm:$0xf]
    %v1197 = vld [vmem:[%s4] sm:$0x1]
    %v1199 = vlaneseq
    %v1200 = vshrl.u32 %v1199, 7
    %v1201 = vsub.s32 0, %v1200
    %v1202 = vrot.slane %v1197, %v1201
    %v1208 = vunpack.c.l.b16 %v1193
    %v1209 = vunpack.c.l.b16 %v1194
    %v1210 = vunpack.c.l.b16 %v1195
    %v1211 = vunpack.c.l.b16 %v1196
    %v1212 = vpack.c.b16 %v1209, %v1208
    %v1213 = vpack.c.b16 %v1211, %v1210
    %v1217 = vsel %vm50, %v1192, 0
    %1219 = vmatprep.subr.bf16.mxu0 0
    %1220 = vmatpush1.bf16.msra.mxu0 %v1212
    %1221 = vmatprep.subr.bf16.mxu0 0
    %1222 = vmatpush1.bf16.msra.mxu0 %v1213
    %1223 = vmatprep.subr.bf16.mxu0 0
    %1224 = vmatpush1.bf16.msra.mxu0 0
    %1225 = vmatprep.subr.bf16.mxu0 0
    %1226 = vmatpush1.bf16.msra.mxu0 0
    %1227 = vmatprep.subr.bf16.mxu0 0
    %1228 = vmatpush1.bf16.msra.mxu0 0
    %1229 = vmatprep.subr.bf16.mxu0 0
    %1230 = vmatpush1.bf16.msra.mxu0 0
    %1231 = vmatprep.subr.bf16.mxu0 0
    %1232 = vmatpush1.bf16.msra.mxu0 0
    %1233 = vmatprep.subr.bf16.mxu0 0
    %1234 = vmatpush1.bf16.msra.mxu0 0
    %1235 = vmatprep.subr.bf16.mxu0 0
    %1236 = vmatpush1.bf16.msra.mxu0 0
    %1237 = vmatprep.subr.bf16.mxu0 0
    %1238 = vmatpush1.bf16.msra.mxu0 0
    %1239 = vmatprep.subr.bf16.mxu0 0
    %1240 = vmatpush1.bf16.msra.mxu0 0
    %1241 = vmatprep.subr.bf16.mxu0 0
    %1242 = vmatpush1.bf16.msra.mxu0 0
    %1243 = vmatprep.subr.bf16.mxu0 0
    %1244 = vmatpush1.bf16.msra.mxu0 0
    %1245 = vmatprep.subr.bf16.mxu0 0
    %1246 = vmatpush1.bf16.msra.mxu0 0
    %1247 = vmatprep.subr.bf16.mxu0 0
    %1248 = vmatpush1.bf16.msra.mxu0 0
    %1249 = vmatprep.subr.bf16.mxu0 0
    %1250 = vmatpush1.bf16.msra.mxu0 0
    %1251 = vmatprep.mubr.bf16.mxu0 0
    %1252 = vmatmul.mubr.bf16.gmra.mrb[0].mxu0 %v1217
    %v1253 = vpop.f32.mrb[0].mxu0
    %v1254 = vadd.f32 %v1202, %v1253
    %v1255 = vpop.f32.mrb[0].mxu0
    %v1256 = vpop.f32.mrb[0].mxu0
    %v1257 = vadd.f32 %v1202, %v1256
    %v1258 = vpop.f32.mrb[0].mxu0
    %1259 = vdwg.mxu0
    %v1260 = vadd.f32 %v46, %v1254
    %v1261 = vadd.f32 %v47, %v1257
    %v1262 = vld [vmem:[%s7] sm:$0x1]
    %v1263 = vld [vmem:[%s8] sm:$0x1]
    %v1264 = vsel %vm50, %v1260, 0.0
    %1265 = vadd.xlane.f32.xlu0 %v1264
    %v1266 = vpop.xlane.xlu0 %1265
    %v1267 = vsel %vm50, %v1261, 0.0
    %1268 = vadd.xlane.f32.xlu0 %v1267
    %v1269 = vpop.xlane.xlu0 %1268
    %v1270 = vmul.f32 %v1266, %v57
    %v1271 = vmul.f32 %v1269, %v57
    %v1272 = vsub.f32 %v1260, %v1270
    %v1273 = vsub.f32 %v1261, %v1271
    %v1274 = vmul.f32 %v1272, %v1272
    %v1275 = vmul.f32 %v1273, %v1273
    %v1276 = vsel %vm50, %v1274, 0.0
    %1277 = vadd.xlane.f32.xlu0 %v1276
    %v1278 = vpop.xlane.xlu0 %1277
    %v1279 = vsel %vm50, %v1275, 0.0
    %1280 = vadd.xlane.f32.xlu0 %v1279
    %v1281 = vpop.xlane.xlu0 %1280
    %v1282 = vmul.f32 %v1278, %v57
    %v1283 = vmul.f32 %v1281, %v57
    %v1284 = vadd.f32 %v1282, 1e-05
    %v1285 = vadd.f32 %v1283, 1e-05
    %v1286 = vrsqrt.pop %v1284
    %v1287 = vrsqrt.pop %v1285
    %v1288 = vmul.f32 %v1272, %v1286
    %v1289 = vmul.f32 %v1273, %v1287
    %v1291 = vlaneseq
    %v1292 = vshrl.u32 %v1291, 7
    %v1293 = vsub.s32 0, %v1292
    %v1294 = vrot.slane %v1262, %v1293
    %v1296 = vmul.f32 %v1288, %v1294
    %v1297 = vmul.f32 %v1289, %v1294
    %v1299 = vlaneseq
    %v1300 = vshrl.u32 %v1299, 7
    %v1301 = vsub.s32 0, %v1300
    %v1302 = vrot.slane %v1263, %v1301
    %v1304 = vadd.f32 %v1296, %v1302
    %v1305 = vadd.f32 %v1297, %v1302
    %v1306 = vpack.c.bf16 %v1305, %v1304
    %v1307 = vld [vmem:[%s9] sm:$0xf]
    %v1308 = vld [vmem:[%s9 + $0x4] sm:$0xf]
    %v1309 = vld [vmem:[%s9 + $0x8] sm:$0xf]
    %v1310 = vld [vmem:[%s9 + $0xc] sm:$0xf]
    %v1311 = vld [vmem:[%s10] sm:$0x1]
    %v1313 = vlaneseq
    %v1314 = vshrl.u32 %v1313, 7
    %v1315 = vsub.s32 0, %v1314
    %v1316 = vrot.slane %v1311, %v1315
    %v1322 = vunpack.c.l.b16 %v1307
    %v1323 = vunpack.c.l.b16 %v1308
    %v1324 = vunpack.c.l.b16 %v1309
    %v1325 = vunpack.c.l.b16 %v1310
    %v1326 = vpack.c.b16 %v1323, %v1322
    %v1327 = vpack.c.b16 %v1325, %v1324
    %v1331 = vsel %vm50, %v1306, 0
    %1333 = vmatprep.subr.bf16.mxu0 0
    %1334 = vmatpush1.bf16.msra.mxu0 %v1326
    %1335 = vmatprep.subr.bf16.mxu0 0
    %1336 = vmatpush1.bf16.msra.mxu0 %v1327
    %1337 = vmatprep.subr.bf16.mxu0 0
    %1338 = vmatpush1.bf16.msra.mxu0 0
    %1339 = vmatprep.subr.bf16.mxu0 0
    %1340 = vmatpush1.bf16.msra.mxu0 0
    %1341 = vmatprep.subr.bf16.mxu0 0
    %1342 = vmatpush1.bf16.msra.mxu0 0
    %1343 = vmatprep.subr.bf16.mxu0 0
    %1344 = vmatpush1.bf16.msra.mxu0 0
    %1345 = vmatprep.subr.bf16.mxu0 0
    %1346 = vmatpush1.bf16.msra.mxu0 0
    %1347 = vmatprep.subr.bf16.mxu0 0
    %1348 = vmatpush1.bf16.msra.mxu0 0
    %1349 = vmatprep.subr.bf16.mxu0 0
    %1350 = vmatpush1.bf16.msra.mxu0 0
    %1351 = vmatprep.subr.bf16.mxu0 0
    %1352 = vmatpush1.bf16.msra.mxu0 0
    %1353 = vmatprep.subr.bf16.mxu0 0
    %1354 = vmatpush1.bf16.msra.mxu0 0
    %1355 = vmatprep.subr.bf16.mxu0 0
    %1356 = vmatpush1.bf16.msra.mxu0 0
    %1357 = vmatprep.subr.bf16.mxu0 0
    %1358 = vmatpush1.bf16.msra.mxu0 0
    %1359 = vmatprep.subr.bf16.mxu0 0
    %1360 = vmatpush1.bf16.msra.mxu0 0
    %1361 = vmatprep.subr.bf16.mxu0 0
    %1362 = vmatpush1.bf16.msra.mxu0 0
    %1363 = vmatprep.subr.bf16.mxu0 0
    %1364 = vmatpush1.bf16.msra.mxu0 0
    %1365 = vmatprep.mubr.bf16.mxu0 0
    %1366 = vmatmul.mubr.bf16.gmra.mrb[0].mxu0 %v1331
    %v1367 = vpop.f32.mrb[0].mxu0
    %v1368 = vadd.f32 %v1316, %v1367
    %v1369 = vpop.f32.mrb[0].mxu0
    %v1370 = vpop.f32.mrb[0].mxu0
    %v1371 = vadd.f32 %v1316, %v1370
    %v1372 = vpop.f32.mrb[0].mxu0
    %1373 = vdwg.mxu0
    %v1374 = vmul.f32 %v1368, 1.702
    %v1375 = vmul.f32 %v1371, 1.702
    %v1376 = vxor.u32 %v1374, 2147483648
    %v1377 = vxor.u32 %v1375, 2147483648
    %v1378 = vmul.f32 %v1376, 1.442695
    %v1379 = vpow.pop %v1378
    %v1380 = vmul.f32 %v1377, 1.442695
    %v1381 = vpow.pop %v1380
    %v1382 = vadd.f32 %v1379, 1.0
    %v1383 = vadd.f32 %v1381, 1.0
    %v1384 = vrcp.pop %v1382
    %v1385 = vmul.f32 1.0, %v1384
    %v1386 = vrcp.pop %v1383
    %v1387 = vmul.f32 1.0, %v1386
    %v1388 = vmul.f32 %v1368, %v1385
    %v1389 = vmul.f32 %v1371, %v1387
    %v1390 = vpack.c.bf16 %v1389, %v1388
    %v1391 = vld [vmem:[%s11] sm:$0xf]
    %v1392 = vld [vmem:[%s11 + $0x4] sm:$0xf]
    %v1393 = vld [vmem:[%s11 + $0x8] sm:$0xf]
    %v1394 = vld [vmem:[%s11 + $0xc] sm:$0xf]
    %v1395 = vld [vmem:[%s11 + $0x10] sm:$0xf]
    %v1396 = vld [vmem:[%s11 + $0x14] sm:$0xf]
    %v1397 = vld [vmem:[%s11 + $0x18] sm:$0xf]
    %v1398 = vld [vmem:[%s11 + $0x1c] sm:$0xf]
    %v1399 = vld [vmem:[%s11 + $0x20] sm:$0xf]
    %v1400 = vld [vmem:[%s11 + $0x24] sm:$0xf]
    %v1401 = vld [vmem:[%s11 + $0x28] sm:$0xf]
    %v1402 = vld [vmem:[%s11 + $0x2c] sm:$0xf]
    %v1403 = vld [vmem:[%s11 + $0x30] sm:$0xf]
    %v1404 = vld [vmem:[%s11 + $0x34] sm:$0xf]
    %v1405 = vld [vmem:[%s11 + $0x38] sm:$0xf]
    %v1406 = vld [vmem:[%s11 + $0x3c] sm:$0xf]
    %v1423 = vunpack.c.l.b16 %v1391
    %v1424 = vunpack.c.l.b16 %v1392
    %v1425 = vunpack.c.l.b16 %v1393
    %v1426 = vunpack.c.l.b16 %v1394
    %v1427 = vunpack.c.l.b16 %v1395
    %v1428 = vunpack.c.l.b16 %v1396
    %v1429 = vunpack.c.l.b16 %v1397
    %v1430 = vunpack.c.l.b16 %v1398
    %v1431 = vunpack.c.l.b16 %v1399
    %v1432 = vunpack.c.l.b16 %v1400
    %v1433 = vunpack.c.l.b16 %v1401
    %v1434 = vunpack.c.l.b16 %v1402
    %v1435 = vunpack.c.l.b16 %v1403
    %v1436 = vunpack.c.l.b16 %v1404
    %v1437 = vunpack.c.l.b16 %v1405
    %v1438 = vunpack.c.l.b16 %v1406
    %v1439 = vpack.c.b16 %v1424, %v1423
    %v1440 = vpack.c.b16 %v1426, %v1425
    %v1441 = vpack.c.b16 %v1428, %v1427
    %v1442 = vpack.c.b16 %v1430, %v1429
    %v1443 = vpack.c.b16 %v1432, %v1431
    %v1444 = vpack.c.b16 %v1434, %v1433
    %v1445 = vpack.c.b16 %v1436, %v1435
    %v1446 = vpack.c.b16 %v1438, %v1437
    %1455 = vmatprep.subr.bf16.mxu0 0
    %1456 = vmatpush1.bf16.msra.mxu0 %v1439
    %1457 = vmatprep.subr.bf16.mxu0 0
    %1458 = vmatpush1.bf16.msra.mxu0 %v1440
    %1459 = vmatprep.subr.bf16.mxu0 0
    %1460 = vmatpush1.bf16.msra.mxu0 %v1441
    %1461 = vmatprep.subr.bf16.mxu0 0
    %1462 = vmatpush1.bf16.msra.mxu0 %v1442
    %1463 = vmatprep.subr.bf16.mxu0 0
    %1464 = vmatpush1.bf16.msra.mxu0 %v1443
    %1465 = vmatprep.subr.bf16.mxu0 0
    %1466 = vmatpush1.bf16.msra.mxu0 %v1444
    %1467 = vmatprep.subr.bf16.mxu0 0
    %1468 = vmatpush1.bf16.msra.mxu0 %v1445
    %1469 = vmatprep.subr.bf16.mxu0 0
    %1470 = vmatpush1.bf16.msra.mxu0 %v1446
    %1471 = vmatprep.subr.bf16.mxu0 0
    %1472 = vmatpush1.bf16.msra.mxu0 0
    %1473 = vmatprep.subr.bf16.mxu0 0
    %1474 = vmatpush1.bf16.msra.mxu0 0
    %1475 = vmatprep.subr.bf16.mxu0 0
    %1476 = vmatpush1.bf16.msra.mxu0 0
    %1477 = vmatprep.subr.bf16.mxu0 0
    %1478 = vmatpush1.bf16.msra.mxu0 0
    %1479 = vmatprep.subr.bf16.mxu0 0
    %1480 = vmatpush1.bf16.msra.mxu0 0
    %1481 = vmatprep.subr.bf16.mxu0 0
    %1482 = vmatpush1.bf16.msra.mxu0 0
    %1483 = vmatprep.subr.bf16.mxu0 0
    %1484 = vmatpush1.bf16.msra.mxu0 0
    %1485 = vmatprep.subr.bf16.mxu0 0
    %1486 = vmatpush1.bf16.msra.mxu0 0
    %1487 = vmatprep.mubr.bf16.mxu0 0
    %1488 = vmatmul.mubr.bf16.gmra.mrb[0].mxu0 %v1390
    %v1489 = vpop.f32.mrb[0].mxu0
    %v1490 = vadd.f32 0.0, %v1489
    %v1491 = vpop.f32.mrb[0].mxu0
    %v1492 = vpop.f32.mrb[0].mxu0
    %v1493 = vadd.f32 0.0, %v1492
    %v1494 = vpop.f32.mrb[0].mxu0
    %1495 = vdwg.mxu0
    %v1496 = vadd.f32 %v1260, %v1490
    %v1497 = vadd.f32 %v1261, %v1493
    %v1498 = vld [vmem:[%s12] sm:$0x1]
    %v1500 = vlaneseq
    %v1501 = vshrl.u32 %v1500, 7
    %v1502 = vsub.s32 0, %v1501
    %v1503 = vrot.slane %v1498, %v1502
    %v1505 = vadd.f32 %v1496, %v1503
    %v1506 = vadd.f32 %v1497, %v1503
    %1507 = vst.msk [vmem:[#allocation6] sm:$0xff] %vm50, %v1505
    %1508 = vst.msk [vmem:[#allocation6 + $0x8] sm:$0xff] %vm50, %v1506
    // Predicated region
    $region54: #{tpu_custom_call.1} parent=1 // pred_check
      _
    $region55: #{tpu_custom_call.1} parent=1 // pred_check_branch
      %1510 = sbr.rel (0) target = $region57
    $region56: #{tpu_custom_call.1} parent=1 // pred_region
      %s1512 = ssub.s32 256, 256
      %1513 = vsyncadd [#allocation7], %s1512
      %s1514 = sshll.u32 [#allocation6], 4
      %s1515 = int_to_ptr.vmem [resolvable:$true] %s1514
      %1520 = dma.vmem_to_hbm [thread:$0]  %s1515, 256, %s13, [#allocation7], 128, 128, 8
    $region57: #{tpu_custom_call.1} parent=1 // pred_fallthru
      _
    // Predicated region
    $region58: #{tpu_custom_call.1} parent=1 // pred_check
      _
    $region59: #{tpu_custom_call.1} parent=1 // pred_check_branch
      %1522 = sbr.rel (0) target = $region61
    $region60: #{tpu_custom_call.1} parent=1 // pred_region
      %1523 = dma.done [#allocation7], 256
    $region61: #{tpu_custom_call.1} parent=1 // pred_fallthru
      _
    %1524 = vsyncpa [#allocation7], 1

</llo_original>
